<compile_context>
chip_gen: v7x
topology: tpu7x:2x2x1
jax: 0.10.0
libtpu: 0.0.40
codegen_flags: <defaults>
</compile_context>

<pallas_src>
import math

import jax
import jax.numpy as jnp
from jax.experimental import pallas as pl
from jax.experimental.pallas import tpu as pltpu

_LANES = 1024          # lane-dense last dim (multiple of 128)
_MAX_TILE_ROWS = 256   # 256 x 1024 x 4B = 1 MiB per f32 output buffer


def _randn_kernel(seed_ref, o_ref):
    tile_rows, lanes = o_ref.shape
    half = tile_rows // 2

    # ---- globally-unique pair counters: tile offset + in-tile index --------
    row = jax.lax.broadcasted_iota(jnp.int32, (half, lanes), 0)
    col = jax.lax.broadcasted_iota(jnp.int32, (half, lanes), 1)
    pair_idx = pl.program_id(0) * (half * lanes) + row * lanes + col
    c = pair_idx.astype(jnp.uint32) * jnp.uint32(2)

    key = seed_ref[0].astype(jnp.uint32) * jnp.uint32(0x9E3779B9)

    def _mix(x):
        # lowbias32 integer hash (VALU only; EUP is the saturated unit here).
        x = x ^ (x >> jnp.uint32(16))
        x = x * jnp.uint32(0x7FEB352D)
        x = x ^ (x >> jnp.uint32(15))
        x = x * jnp.uint32(0x846CA68B)
        x = x ^ (x >> jnp.uint32(16))
        return x

    bits1 = _mix(c + key)
    bits2 = _mix(c + jnp.uint32(1) + key)

    def _unit(bits):
        # exponent-OR trick: uniform in [0, 1) without int->float convert + mul
        f = jax.lax.bitcast_convert_type(
            (bits >> jnp.uint32(9)) | jnp.uint32(0x3F800000), jnp.float32)
        return f - jnp.float32(1.0)

    u1 = jnp.float32(1.0) - _unit(bits1)   # (0, 1] -> log is finite
    u2 = _unit(bits2)                      # [0, 1)

    # ---- Box-Muller: emit both cos and sin outputs --------------------------
    r = jnp.sqrt(jnp.float32(-2.0) * jnp.log(u1))
    theta = jnp.float32(2.0 * math.pi) * u2

    o_ref[0:half, :] = (r * jnp.cos(theta)).astype(o_ref.dtype)
    o_ref[half:, :] = (r * jnp.sin(theta)).astype(o_ref.dtype)


def randn_like_pallas(x, seed: int = 0):
    """Equivalent of torch.randn_like(x): standard-normal samples, same shape/dtype."""
    total = int(x.size)
    lanes = _LANES

    # Round rows up to a multiple of 16 (even split into two >=8-sublane halves).
    rows_needed = pl.cdiv(total, lanes)
    rows_needed = pl.cdiv(rows_needed, 16) * 16
    tile_rows = min(_MAX_TILE_ROWS, rows_needed)
    rows = pl.cdiv(rows_needed, tile_rows) * tile_rows
    grid = (rows // tile_rows,)
    padded = rows * lanes

    seed_arr = jnp.asarray([seed], dtype=jnp.int32)

    itemsize = jnp.dtype(x.dtype).itemsize
    cost = pl.CostEstimate(
        flops=12 * padded,
        transcendentals=2 * padded,          # (log + sqrt + cos + sin) per pair
        bytes_accessed=padded * itemsize,    # output writeback only
    )

    slab = pl.pallas_call(
        _randn_kernel,
        out_shape=jax.ShapeDtypeStruct((rows, lanes), x.dtype),
        grid=grid,
        in_specs=[pl.BlockSpec(memory_space=pltpu.MemorySpace.SMEM)],
        out_specs=pl.BlockSpec((tile_rows, lanes), lambda i: (i, 0)),
        compiler_params=pltpu.CompilerParams(
            dimension_semantics=("parallel",)),
        cost_estimate=cost,
    )(seed_arr)

    if padded == total:
        return slab.reshape(x.shape)
    return slab.reshape(-1)[:total].reshape(x.shape)


if __name__ == "__main__":
    key = jax.random.PRNGKey(0)
    # Small NCHW input consistent with the module (shape-only dependence).
    x = jax.random.normal(key, (2, 4, 16, 16), dtype=jnp.float32)

    out = randn_like_pallas(x, seed=0)
    out = jax.block_until_ready(out)

    assert out.shape == x.shape, (out.shape, x.shape)
    assert out.dtype == x.dtype, (out.dtype, x.dtype)
    # Loose sanity check on the distribution (2048 samples).
    mean = float(jnp.mean(out))
    std = float(jnp.std(out))
    assert abs(mean) < 0.2, mean
    assert 0.8 < std < 1.2, std

    print("KERNEL_OK")
</pallas_src>

<mosaic_0001>
module attributes {stable_mosaic.version = 11 : i64} {
  func.func @_randn_kernel(%arg0: i32, %arg1: memref<1xi32, #tpu.memory_space<smem>>, %arg2: memref<16x1024xf32, #tpu.memory_space<vmem>>) attributes {dimension_semantics = [#tpu.dimension_semantics<parallel>], iteration_bounds = array<i64: 1>, scalar_prefetch = 0 : i64, scratch_operands = 0 : i64, tpu.core_type = #tpu.core_type<tc>, window_params = [{transform_indices = @transform_0, window_bounds = array<i64: 1>}, {transform_indices = @transform_1, window_bounds = array<i64: 16, 1024>}]} {
    %0 = tpu.iota {dimensions = array<i32: 0>} : vector<8x1024xi32>
    %1 = tpu.iota {dimensions = array<i32: 1>} : vector<8x1024xi32>
    %c8192_i32 = arith.constant 8192 : i32
    %2 = arith.muli %arg0, %c8192_i32 : i32
    %c1024_i32 = arith.constant 1024 : i32
    %3 = vector.broadcast %c1024_i32 : i32 to vector<8x1024xi32>
    %4 = arith.muli %0, %3 : vector<8x1024xi32>
    %5 = vector.broadcast %2 : i32 to vector<8x1024xi32>
    %6 = arith.addi %5, %4 : vector<8x1024xi32>
    %7 = arith.addi %6, %1 : vector<8x1024xi32>
    %c2_i32 = arith.constant 2 : i32
    %8 = vector.broadcast %c2_i32 : i32 to vector<8x1024xi32>
    %9 = arith.muli %7, %8 : vector<8x1024xi32>
    %c0 = arith.constant 0 : index
    %10 = memref.load %arg1[%c0] : memref<1xi32, #tpu.memory_space<smem>>
    %c-1640531527_i32 = arith.constant -1640531527 : i32
    %11 = arith.muli %10, %c-1640531527_i32 : i32
    %12 = vector.broadcast %11 : i32 to vector<8x1024xi32>
    %13 = arith.addi %9, %12 : vector<8x1024xi32>
    %c16_i32 = arith.constant 16 : i32
    %14 = vector.broadcast %c16_i32 : i32 to vector<8x1024xi32>
    %15 = arith.shrui %13, %14 : vector<8x1024xi32>
    %16 = arith.xori %13, %15 : vector<8x1024xi32>
    %c2146121005_i32 = arith.constant 2146121005 : i32
    %17 = vector.broadcast %c2146121005_i32 : i32 to vector<8x1024xi32>
    %18 = arith.muli %16, %17 : vector<8x1024xi32>
    %c15_i32 = arith.constant 15 : i32
    %19 = vector.broadcast %c15_i32 : i32 to vector<8x1024xi32>
    %20 = arith.shrui %18, %19 : vector<8x1024xi32>
    %21 = arith.xori %18, %20 : vector<8x1024xi32>
    %c-2073254261_i32 = arith.constant -2073254261 : i32
    %22 = vector.broadcast %c-2073254261_i32 : i32 to vector<8x1024xi32>
    %23 = arith.muli %21, %22 : vector<8x1024xi32>
    %c16_i32_0 = arith.constant 16 : i32
    %24 = vector.broadcast %c16_i32_0 : i32 to vector<8x1024xi32>
    %25 = arith.shrui %23, %24 : vector<8x1024xi32>
    %26 = arith.xori %23, %25 : vector<8x1024xi32>
    %c1_i32 = arith.constant 1 : i32
    %27 = vector.broadcast %c1_i32 : i32 to vector<8x1024xi32>
    %28 = arith.addi %9, %27 : vector<8x1024xi32>
    %29 = vector.broadcast %11 : i32 to vector<8x1024xi32>
    %30 = arith.addi %28, %29 : vector<8x1024xi32>
    %c16_i32_1 = arith.constant 16 : i32
    %31 = vector.broadcast %c16_i32_1 : i32 to vector<8x1024xi32>
    %32 = arith.shrui %30, %31 : vector<8x1024xi32>
    %33 = arith.xori %30, %32 : vector<8x1024xi32>
    %c2146121005_i32_2 = arith.constant 2146121005 : i32
    %34 = vector.broadcast %c2146121005_i32_2 : i32 to vector<8x1024xi32>
    %35 = arith.muli %33, %34 : vector<8x1024xi32>
    %c15_i32_3 = arith.constant 15 : i32
    %36 = vector.broadcast %c15_i32_3 : i32 to vector<8x1024xi32>
    %37 = arith.shrui %35, %36 : vector<8x1024xi32>
    %38 = arith.xori %35, %37 : vector<8x1024xi32>
    %c-2073254261_i32_4 = arith.constant -2073254261 : i32
    %39 = vector.broadcast %c-2073254261_i32_4 : i32 to vector<8x1024xi32>
    %40 = arith.muli %38, %39 : vector<8x1024xi32>
    %c16_i32_5 = arith.constant 16 : i32
    %41 = vector.broadcast %c16_i32_5 : i32 to vector<8x1024xi32>
    %42 = arith.shrui %40, %41 : vector<8x1024xi32>
    %43 = arith.xori %40, %42 : vector<8x1024xi32>
    %c9_i32 = arith.constant 9 : i32
    %44 = vector.broadcast %c9_i32 : i32 to vector<8x1024xi32>
    %45 = arith.shrui %26, %44 : vector<8x1024xi32>
    %c1065353216_i32 = arith.constant 1065353216 : i32
    %46 = vector.broadcast %c1065353216_i32 : i32 to vector<8x1024xi32>
    %47 = arith.ori %45, %46 : vector<8x1024xi32>
    %48 = tpu.bitcast %47 : vector<8x1024xi32> -> vector<8x1024xf32>
    %cst = arith.constant 1.000000e+00 : f32
    %49 = vector.broadcast %cst : f32 to vector<8x1024xf32>
    %50 = arith.subf %48, %49 : vector<8x1024xf32>
    %cst_6 = arith.constant 1.000000e+00 : f32
    %51 = vector.broadcast %cst_6 : f32 to vector<8x1024xf32>
    %52 = arith.subf %51, %50 : vector<8x1024xf32>
    %c9_i32_7 = arith.constant 9 : i32
    %53 = vector.broadcast %c9_i32_7 : i32 to vector<8x1024xi32>
    %54 = arith.shrui %43, %53 : vector<8x1024xi32>
    %c1065353216_i32_8 = arith.constant 1065353216 : i32
    %55 = vector.broadcast %c1065353216_i32_8 : i32 to vector<8x1024xi32>
    %56 = arith.ori %54, %55 : vector<8x1024xi32>
    %57 = tpu.bitcast %56 : vector<8x1024xi32> -> vector<8x1024xf32>
    %cst_9 = arith.constant 1.000000e+00 : f32
    %58 = vector.broadcast %cst_9 : f32 to vector<8x1024xf32>
    %59 = arith.subf %57, %58 : vector<8x1024xf32>
    %60 = math.log %52 : vector<8x1024xf32>
    %cst_10 = arith.constant -2.000000e+00 : f32
    %61 = vector.broadcast %cst_10 : f32 to vector<8x1024xf32>
    %62 = arith.mulf %61, %60 : vector<8x1024xf32>
    %63 = math.sqrt %62 : vector<8x1024xf32>
    %cst_11 = arith.constant 6.28318548 : f32
    %64 = vector.broadcast %cst_11 : f32 to vector<8x1024xf32>
    %65 = arith.mulf %64, %59 : vector<8x1024xf32>
    %66 = math.cos %65 : vector<8x1024xf32>
    %67 = arith.mulf %63, %66 : vector<8x1024xf32>
    %c0_12 = arith.constant 0 : index
    %c0_13 = arith.constant 0 : index
    %68 = vector.load %arg2[%c0_12, %c0_13] : memref<16x1024xf32, #tpu.memory_space<vmem>>, vector<8x1024xf32>
    tpu.vector_store %arg2[%c0_12, %c0_13], %67 {strides = array<i32>} : memref<16x1024xf32, #tpu.memory_space<vmem>>, vector<8x1024xf32>,
    %69 = math.sin %65 : vector<8x1024xf32>
    %70 = arith.mulf %63, %69 : vector<8x1024xf32>
    %c8 = arith.constant 8 : index
    %c0_14 = arith.constant 0 : index
    %71 = vector.load %arg2[%c8, %c0_14] : memref<16x1024xf32, #tpu.memory_space<vmem>>, vector<8x1024xf32>
    tpu.vector_store %arg2[%c8, %c0_14], %70 {strides = array<i32>} : memref<16x1024xf32, #tpu.memory_space<vmem>>, vector<8x1024xf32>,
    return
  }
  func.func @transform_0(%arg0: i32) -> i32 {
    %c0_i32 = arith.constant 0 : i32
    %c0_i32_0 = arith.constant 0 : i32
    return %c0_i32 : i32
  }
  func.func @transform_1(%arg0: i32) -> (i32, i32) {
    %c0_i32 = arith.constant 0 : i32
    %c0_i32_0 = arith.constant 0 : i32
    return %arg0, %c0_i32 : i32, i32
  }
}

</mosaic_0001>

<llo_original>
// kernel: tpu_custom_call.1
$region0: #{tpu_custom_call.1}
  #allocation0 [shape = 'u32[]', space=smem, size = 0x4, offset = 0x4, fixed_abs, tag = 'smem constant byte address 0x4 - core index']
  #allocation1 [shape = 'u32[144,128]{1,0:T(1,128)}', space=vmem, size = 0x12000, scoped, tag = 'internal scratch']
  #allocation2 [shape = 's32[1]{0:T(128)S(6)}', space=smem, size = 0x200, scoped, tag = 'scoped memory for tpu_custom_call.1']
  %s0 = inlined_call_operand.<no memory space> [shape: s32[1], index: 0, kind: input, shape index: {}]
  %s1 = inlined_call_operand.hbm [shape: f32[16,1024], index: 1, kind: output, shape index: {}]
  %s2 = sld [smem:[#allocation0]]
  $region14: #{tpu_custom_call.1} parent=0
    _
  %s4 = ssub.s32 1, %s2
  %s5 = scalar_select 0, %s4, %s2
  %6 = sst [smem:[#allocation2]] %s0
  $region1: #{tpu_custom_call.1} parent=0
    #allocation3 [shape = 'u8[65536]{0}', space=vmem, size = 0x10000, scoped, tag = 'output window, operand 0, single buffered']
    #allocation4 [shape = 's32[1]{0}', space=sflag, size = 0x4, scoped, tag = 'scoped memory for tpu_custom_call.1']
    %7 = vsyncpa [#allocation4], 0
    // Predicated region
    $region2: #{tpu_custom_call.1} parent=1 // pred_check
      _
    $region3: #{tpu_custom_call.1} parent=1 // pred_check_branch
      %9 = sbr.rel (0) target = $region5
    $region4: #{tpu_custom_call.1} parent=1 // pred_region
      _
    $region5: #{tpu_custom_call.1} parent=1 // pred_fallthru
      _
    %v10 = vlaneseq
    %v11 = vshrl.u32 %v10, 7
    %v12 = vlaneseq
    %v13 = vand.u32 %v12, 127
    %v14 = vadd.s32 %v13, 128
    %v15 = vadd.s32 %v13, 256
    %v16 = vadd.s32 %v13, 384
    %v17 = vadd.s32 %v13, 512
    %v18 = vadd.s32 %v13, 640
    %v19 = vadd.s32 %v13, 768
    %v20 = vadd.s32 %v13, 896
    %s21 = smul.u32 0, 8192
    %v22 = vmul.u32 %v11, 1024
    %v23 = vstv %s21
    %v24 = vadd.s32 %v23, %v22
    %v25 = vadd.s32 %v24, %v13
    %v26 = vadd.s32 %v24, %v14
    %v27 = vadd.s32 %v24, %v15
    %v28 = vadd.s32 %v24, %v16
    %v29 = vadd.s32 %v24, %v17
    %v30 = vadd.s32 %v24, %v18
    %v31 = vadd.s32 %v24, %v19
    %v32 = vadd.s32 %v24, %v20
    %v33 = vmul.u32 %v25, 2
    %v34 = vmul.u32 %v26, 2
    %v35 = vmul.u32 %v27, 2
    %v36 = vmul.u32 %v28, 2
    %v37 = vmul.u32 %v29, 2
    %v38 = vmul.u32 %v30, 2
    %v39 = vmul.u32 %v31, 2
    %v40 = vmul.u32 %v32, 2
    %s41 = sld [smem:[#allocation2]]
    %s42 = smul.u32 %s41, 2654435769
    %v43 = vstv %s42
    %v44 = vadd.s32 %v33, %v43
    %v45 = vadd.s32 %v34, %v43
    %v46 = vadd.s32 %v35, %v43
    %v47 = vadd.s32 %v36, %v43
    %v48 = vadd.s32 %v37, %v43
    %v49 = vadd.s32 %v38, %v43
    %v50 = vadd.s32 %v39, %v43
    %v51 = vadd.s32 %v40, %v43
    %v52 = vshrl.u32 %v44, 16
    %v53 = vshrl.u32 %v45, 16
    %v54 = vshrl.u32 %v46, 16
    %v55 = vshrl.u32 %v47, 16
    %v56 = vshrl.u32 %v48, 16
    %v57 = vshrl.u32 %v49, 16
    %v58 = vshrl.u32 %v50, 16
    %v59 = vshrl.u32 %v51, 16
    %v60 = vxor.u32 %v44, %v52
    %v61 = vxor.u32 %v45, %v53
    %v62 = vxor.u32 %v46, %v54
    %v63 = vxor.u32 %v47, %v55
    %v64 = vxor.u32 %v48, %v56
    %v65 = vxor.u32 %v49, %v57
    %v66 = vxor.u32 %v50, %v58
    %v67 = vxor.u32 %v51, %v59
    %v68 = vmul.u32 %v60, 2146121005
    %v69 = vmul.u32 %v61, 2146121005
    %v70 = vmul.u32 %v62, 2146121005
    %v71 = vmul.u32 %v63, 2146121005
    %v72 = vmul.u32 %v64, 2146121005
    %v73 = vmul.u32 %v65, 2146121005
    %v74 = vmul.u32 %v66, 2146121005
    %v75 = vmul.u32 %v67, 2146121005
    %v76 = vshrl.u32 %v68, 15
    %v77 = vshrl.u32 %v69, 15
    %v78 = vshrl.u32 %v70, 15
    %v79 = vshrl.u32 %v71, 15
    %v80 = vshrl.u32 %v72, 15
    %v81 = vshrl.u32 %v73, 15
    %v82 = vshrl.u32 %v74, 15
    %v83 = vshrl.u32 %v75, 15
    %v84 = vxor.u32 %v68, %v76
    %v85 = vxor.u32 %v69, %v77
    %v86 = vxor.u32 %v70, %v78
    %v87 = vxor.u32 %v71, %v79
    %v88 = vxor.u32 %v72, %v80
    %v89 = vxor.u32 %v73, %v81
    %v90 = vxor.u32 %v74, %v82
    %v91 = vxor.u32 %v75, %v83
    %v92 = vmul.u32 %v84, 2221713035
    %v93 = vmul.u32 %v85, 2221713035
    %v94 = vmul.u32 %v86, 2221713035
    %v95 = vmul.u32 %v87, 2221713035
    %v96 = vmul.u32 %v88, 2221713035
    %v97 = vmul.u32 %v89, 2221713035
    %v98 = vmul.u32 %v90, 2221713035
    %v99 = vmul.u32 %v91, 2221713035
    %v100 = vshrl.u32 %v92, 16
    %v101 = vshrl.u32 %v93, 16
    %v102 = vshrl.u32 %v94, 16
    %v103 = vshrl.u32 %v95, 16
    %v104 = vshrl.u32 %v96, 16
    %v105 = vshrl.u32 %v97, 16
    %v106 = vshrl.u32 %v98, 16
    %v107 = vshrl.u32 %v99, 16
    %v108 = vxor.u32 %v92, %v100
    %v109 = vxor.u32 %v93, %v101
    %v110 = vxor.u32 %v94, %v102
    %v111 = vxor.u32 %v95, %v103
    %v112 = vxor.u32 %v96, %v104
    %v113 = vxor.u32 %v97, %v105
    %v114 = vxor.u32 %v98, %v106
    %v115 = vxor.u32 %v99, %v107
    %v116 = vadd.s32 %v33, 1
    %v117 = vadd.s32 %v34, 1
    %v118 = vadd.s32 %v35, 1
    %v119 = vadd.s32 %v36, 1
    %v120 = vadd.s32 %v37, 1
    %v121 = vadd.s32 %v38, 1
    %v122 = vadd.s32 %v39, 1
    %v123 = vadd.s32 %v40, 1
    %v124 = vadd.s32 %v116, %v43
    %v125 = vadd.s32 %v117, %v43
    %v126 = vadd.s32 %v118, %v43
    %v127 = vadd.s32 %v119, %v43
    %v128 = vadd.s32 %v120, %v43
    %v129 = vadd.s32 %v121, %v43
    %v130 = vadd.s32 %v122, %v43
    %v131 = vadd.s32 %v123, %v43
    %v132 = vshrl.u32 %v124, 16
    %v133 = vshrl.u32 %v125, 16
    %v134 = vshrl.u32 %v126, 16
    %v135 = vshrl.u32 %v127, 16
    %v136 = vshrl.u32 %v128, 16
    %v137 = vshrl.u32 %v129, 16
    %v138 = vshrl.u32 %v130, 16
    %v139 = vshrl.u32 %v131, 16
    %v140 = vxor.u32 %v124, %v132
    %v141 = vxor.u32 %v125, %v133
    %v142 = vxor.u32 %v126, %v134
    %v143 = vxor.u32 %v127, %v135
    %v144 = vxor.u32 %v128, %v136
    %v145 = vxor.u32 %v129, %v137
    %v146 = vxor.u32 %v130, %v138
    %v147 = vxor.u32 %v131, %v139
    %v148 = vmul.u32 %v140, 2146121005
    %v149 = vmul.u32 %v141, 2146121005
    %v150 = vmul.u32 %v142, 2146121005
    %v151 = vmul.u32 %v143, 2146121005
    %v152 = vmul.u32 %v144, 2146121005
    %v153 = vmul.u32 %v145, 2146121005
    %v154 = vmul.u32 %v146, 2146121005
    %v155 = vmul.u32 %v147, 2146121005
    %v156 = vshrl.u32 %v148, 15
    %v157 = vshrl.u32 %v149, 15
    %v158 = vshrl.u32 %v150, 15
    %v159 = vshrl.u32 %v151, 15
    %v160 = vshrl.u32 %v152, 15
    %v161 = vshrl.u32 %v153, 15
    %v162 = vshrl.u32 %v154, 15
    %v163 = vshrl.u32 %v155, 15
    %v164 = vxor.u32 %v148, %v156
    %v165 = vxor.u32 %v149, %v157
    %v166 = vxor.u32 %v150, %v158
    %v167 = vxor.u32 %v151, %v159
    %v168 = vxor.u32 %v152, %v160
    %v169 = vxor.u32 %v153, %v161
    %v170 = vxor.u32 %v154, %v162
    %v171 = vxor.u32 %v155, %v163
    %v172 = vmul.u32 %v164, 2221713035
    %v173 = vmul.u32 %v165, 2221713035
    %v174 = vmul.u32 %v166, 2221713035
    %v175 = vmul.u32 %v167, 2221713035
    %v176 = vmul.u32 %v168, 2221713035
    %v177 = vmul.u32 %v169, 2221713035
    %v178 = vmul.u32 %v170, 2221713035
    %v179 = vmul.u32 %v171, 2221713035
    %v180 = vshrl.u32 %v172, 16
    %v181 = vshrl.u32 %v173, 16
    %v182 = vshrl.u32 %v174, 16
    %v183 = vshrl.u32 %v175, 16
    %v184 = vshrl.u32 %v176, 16
    %v185 = vshrl.u32 %v177, 16
    %v186 = vshrl.u32 %v178, 16
    %v187 = vshrl.u32 %v179, 16
    %v188 = vxor.u32 %v172, %v180
    %v189 = vxor.u32 %v173, %v181
    %v190 = vxor.u32 %v174, %v182
    %v191 = vxor.u32 %v175, %v183
    %v192 = vxor.u32 %v176, %v184
    %v193 = vxor.u32 %v177, %v185
    %v194 = vxor.u32 %v178, %v186
    %v195 = vxor.u32 %v179, %v187
    %v196 = vshrl.u32 %v108, 9
    %v197 = vshrl.u32 %v109, 9
    %v198 = vshrl.u32 %v110, 9
    %v199 = vshrl.u32 %v111, 9
    %v200 = vshrl.u32 %v112, 9
    %v201 = vshrl.u32 %v113, 9
    %v202 = vshrl.u32 %v114, 9
    %v203 = vshrl.u32 %v115, 9
    %v204 = vor.u32 %v196, 1065353216
    %v205 = vor.u32 %v197, 1065353216
    %v206 = vor.u32 %v198, 1065353216
    %v207 = vor.u32 %v199, 1065353216
    %v208 = vor.u32 %v200, 1065353216
    %v209 = vor.u32 %v201, 1065353216
    %v210 = vor.u32 %v202, 1065353216
    %v211 = vor.u32 %v203, 1065353216
    %v220 = vsub.f32 %v204, 1.0
    %v221 = vsub.f32 %v205, 1.0
    %v222 = vsub.f32 %v206, 1.0
    %v223 = vsub.f32 %v207, 1.0
    %v224 = vsub.f32 %v208, 1.0
    %v225 = vsub.f32 %v209, 1.0
    %v226 = vsub.f32 %v210, 1.0
    %v227 = vsub.f32 %v211, 1.0
    %v228 = vsub.f32 1.0, %v220
    %v229 = vsub.f32 1.0, %v221
    %v230 = vsub.f32 1.0, %v222
    %v231 = vsub.f32 1.0, %v223
    %v232 = vsub.f32 1.0, %v224
    %v233 = vsub.f32 1.0, %v225
    %v234 = vsub.f32 1.0, %v226
    %v235 = vsub.f32 1.0, %v227
    %v236 = vshrl.u32 %v188, 9
    %v237 = vshrl.u32 %v189, 9
    %v238 = vshrl.u32 %v190, 9
    %v239 = vshrl.u32 %v191, 9
    %v240 = vshrl.u32 %v192, 9
    %v241 = vshrl.u32 %v193, 9
    %v242 = vshrl.u32 %v194, 9
    %v243 = vshrl.u32 %v195, 9
    %v244 = vor.u32 %v236, 1065353216
    %v245 = vor.u32 %v237, 1065353216
    %v246 = vor.u32 %v238, 1065353216
    %v247 = vor.u32 %v239, 1065353216
    %v248 = vor.u32 %v240, 1065353216
    %v249 = vor.u32 %v241, 1065353216
    %v250 = vor.u32 %v242, 1065353216
    %v251 = vor.u32 %v243, 1065353216
    %v260 = vsub.f32 %v244, 1.0
    %v261 = vsub.f32 %v245, 1.0
    %v262 = vsub.f32 %v246, 1.0
    %v263 = vsub.f32 %v247, 1.0
    %v264 = vsub.f32 %v248, 1.0
    %v265 = vsub.f32 %v249, 1.0
    %v266 = vsub.f32 %v250, 1.0
    %v267 = vsub.f32 %v251, 1.0
    %v268 = vlog2.pop %v228
    %v269 = vmul.f32 %v268, 0.6931472
    %v270 = vlog2.pop %v229
    %v271 = vmul.f32 %v270, 0.6931472
    %v272 = vlog2.pop %v230
    %v273 = vmul.f32 %v272, 0.6931472
    %v274 = vlog2.pop %v231
    %v275 = vmul.f32 %v274, 0.6931472
    %v276 = vlog2.pop %v232
    %v277 = vmul.f32 %v276, 0.6931472
    %v278 = vlog2.pop %v233
    %v279 = vmul.f32 %v278, 0.6931472
    %v280 = vlog2.pop %v234
    %v281 = vmul.f32 %v280, 0.6931472
    %v282 = vlog2.pop %v235
    %v283 = vmul.f32 %v282, 0.6931472
    %v284 = vmul.f32 %v269, -2.0
    %v285 = vmul.f32 %v271, -2.0
    %v286 = vmul.f32 %v273, -2.0
    %v287 = vmul.f32 %v275, -2.0
    %v288 = vmul.f32 %v277, -2.0
    %v289 = vmul.f32 %v279, -2.0
    %v290 = vmul.f32 %v281, -2.0
    %v291 = vmul.f32 %v283, -2.0
    %v292 = vrsqrt.pop %v284
    %v293 = vmul.f32 %v284, %v292
    %vm294 = vcmp.eq.f32.partialorder %v284, inf
    %v295 = vsel %vm294, %v284, %v293
    %vm296 = vcmp.eq.f32.partialorder %v284, 0.0
    %v297 = vand.u32 %v284, 2147483648
    %v298 = vsel %vm296, %v297, %v295
    %v299 = vrsqrt.pop %v285
    %v300 = vmul.f32 %v285, %v299
    %vm301 = vcmp.eq.f32.partialorder %v285, inf
    %v302 = vsel %vm301, %v285, %v300
    %vm303 = vcmp.eq.f32.partialorder %v285, 0.0
    %v304 = vand.u32 %v285, 2147483648
    %v305 = vsel %vm303, %v304, %v302
    %v306 = vrsqrt.pop %v286
    %v307 = vmul.f32 %v286, %v306
    %vm308 = vcmp.eq.f32.partialorder %v286, inf
    %v309 = vsel %vm308, %v286, %v307
    %vm310 = vcmp.eq.f32.partialorder %v286, 0.0
    %v311 = vand.u32 %v286, 2147483648
    %v312 = vsel %vm310, %v311, %v309
    %v313 = vrsqrt.pop %v287
    %v314 = vmul.f32 %v287, %v313
    %vm315 = vcmp.eq.f32.partialorder %v287, inf
    %v316 = vsel %vm315, %v287, %v314
    %vm317 = vcmp.eq.f32.partialorder %v287, 0.0
    %v318 = vand.u32 %v287, 2147483648
    %v319 = vsel %vm317, %v318, %v316
    %v320 = vrsqrt.pop %v288
    %v321 = vmul.f32 %v288, %v320
    %vm322 = vcmp.eq.f32.partialorder %v288, inf
    %v323 = vsel %vm322, %v288, %v321
    %vm324 = vcmp.eq.f32.partialorder %v288, 0.0
    %v325 = vand.u32 %v288, 2147483648
    %v326 = vsel %vm324, %v325, %v323
    %v327 = vrsqrt.pop %v289
    %v328 = vmul.f32 %v289, %v327
    %vm329 = vcmp.eq.f32.partialorder %v289, inf
    %v330 = vsel %vm329, %v289, %v328
    %vm331 = vcmp.eq.f32.partialorder %v289, 0.0
    %v332 = vand.u32 %v289, 2147483648
    %v333 = vsel %vm331, %v332, %v330
    %v334 = vrsqrt.pop %v290
    %v335 = vmul.f32 %v290, %v334
    %vm336 = vcmp.eq.f32.partialorder %v290, inf
    %v337 = vsel %vm336, %v290, %v335
    %vm338 = vcmp.eq.f32.partialorder %v290, 0.0
    %v339 = vand.u32 %v290, 2147483648
    %v340 = vsel %vm338, %v339, %v337
    %v341 = vrsqrt.pop %v291
    %v342 = vmul.f32 %v291, %v341
    %vm343 = vcmp.eq.f32.partialorder %v291, inf
    %v344 = vsel %vm343, %v291, %v342
    %vm345 = vcmp.eq.f32.partialorder %v291, 0.0
    %v346 = vand.u32 %v291, 2147483648
    %v347 = vsel %vm345, %v346, %v344
    %v348 = vmul.f32 %v260, 6.2831855
    %v349 = vmul.f32 %v261, 6.2831855
    %v350 = vmul.f32 %v262, 6.2831855
    %v351 = vmul.f32 %v263, 6.2831855
    %v352 = vmul.f32 %v264, 6.2831855
    %v353 = vmul.f32 %v265, 6.2831855
    %v354 = vmul.f32 %v266, 6.2831855
    %v355 = vmul.f32 %v267, 6.2831855
    %v356 = vand.u32 2147483647, %v348
    %vm357 = vcmp.le.f32.partialorder %v356, 0.7853982
    %vm358 = vcmp.lt.s32.totalorder %v348, 0
    %v359 = vand.u32 %v348, 2139095040
    %v360 = vshrl.u32 %v359, 23
    %v361 = vsub.s32 %v360, 127
    %v362 = vand.u32 2147483647, %v348
    %v363 = vand.u32 %v362, 8388607
    %v364 = vor.u32 %v363, 8388608
    %v365 = vsub.s32 0, %v364
    %v366 = vadd.s32 %v361, 1
    %vm367 = vcmp.gt.s32.totalorder %v366, 0
    %v368 = vsel %vm367, %v366, 0
    %v369 = vshrl.u32 %v368, 5
    %v370 = vand.u32 %v368, 31
    %v371 = vsub.s32 32, %v370
    %v372 = vshrl.u32 683565275, %v371
    %v373 = vshll.u32 683565275, %v370
    %v374 = vshrl.u32 2475754826, %v371
    %v375 = vor.u32 %v373, %v374
    %v376 = vshll.u32 2475754826, %v370
    %v377 = vshrl.u32 2131351028, %v371
    %v378 = vor.u32 %v376, %v377
    %v379 = vshll.u32 2131351028, %v370
    %v380 = vshrl.u32 2102212464, %v371
    %v381 = vor.u32 %v379, %v380
    %v382 = vshll.u32 2102212464, %v370
    %v383 = vshrl.u32 920167782, %v371
    %v384 = vor.u32 %v382, %v383
    %v385 = vshll.u32 920167782, %v370
    %v386 = vshrl.u32 1326507024, %v371
    %v387 = vor.u32 %v385, %v386
    %vm388 = vcmp.lt.s32.totalorder %v369, 1
    %vm389 = vcmp.lt.s32.totalorder %v369, 2
    %vm390 = vcmp.lt.s32.totalorder %v369, 3
    %vm391 = vcmp.lt.s32.totalorder %v369, 4
    %v392 = vsel %vm388, %v372, %v375
    %v393 = vsel %vm391, %v381, 2102212464
    %v394 = vsel %vm390, %v378, %v393
    %v395 = vsel %vm389, %v392, %v394
    %v396 = vsel %vm388, %v375, %v378
    %v397 = vsel %vm391, %v384, 920167782
    %v398 = vsel %vm390, %v381, %v397
    %v399 = vsel %vm389, %v396, %v398
    %v400 = vsel %vm388, %v378, %v381
    %v401 = vsel %vm391, %v387, 1326507024
    %v402 = vsel %vm390, %v384, %v401
    %v403 = vsel %vm389, %v400, %v402
    %v404 = vshll.u32 %v364, 8
    %v405 = vmul.u32.u64.compose %v404, %v403
    %v406 = vextract.low.u32 %v405
    %v407 = vextract.high.u32 %v405
    %v408 = vmul.u32.u64.compose %v404, %v399
    %v409 = vextract.low.u32 %v408
    %v410 = vextract.high.u32 %v408
    %v411 = vmul.u32 %v404, %v395
    %v412 = vadd.s32 %v407, %v409
    %vm413 = vc.u32 %v407, %v409
    %v414 = vadd.s32 %v410, 1
    %v415 = vsel %vm413, %v414, %v410
    %v416 = vadd.s32 %v411, %v415
    %v417 = vadd.s32 %v416, 536870912
    %v418 = vshrl.u32 %v417, 30
    %v419 = vshll.u32 %v418, 30
    %v420 = vsub.s32 %v416, %v419
    %vm421 = vcmp.lt.s32.totalorder %v420, 0
    %v422 = vsub.s32 0, %v420
    %v423 = vsel %vm421, %v422, %v420
    %v424 = vclz %v423
    %v425 = vsub.s32 %v424, 2
    %vm426 = vcmp.gt.s32.totalorder 0, %v425
    %v427 = vsel %vm426, 0, %v425
    %v428 = vsub.s32 32, %v427
    %v429 = vshll.u32 %v420, %v427
    %v430 = vshrl.u32 %v412, %v428
    %v431 = vor.u32 %v429, %v430
    %v432 = vsub.s32 4294967266, %v427
    %v433 = vadd.s32 %v432, 127
    %v434 = vshll.u32 %v433, 23
    %v435 = vor.u32 4788187, %v434
    %v436 = vand.u32 2147483647, %v435
    %v438 = vcvt.s32.f32 %v431
    %v439 = vmul.f32 %v438, %v436
    %v440 = vxor.u32 %v439, 2147483648
    %v441 = vsel %vm358, %v440, %v439
    %v442 = vsub.s32 4, %v418
    %v443 = vsel %vm358, %v442, %v418
    %v444 = vsel %vm357, %v348, %v441
    %v445 = vsel %vm357, 0, %v443
    %v446 = vcosq.f32.pop %v444
    %v447 = vsinq.f32.pop %v444
    %vm448 = vweird.f32 %v348
    %v449 = vand.u32 %v445, 3
    %vm450 = vcmp.lt.s32.totalorder %v449, 2
    %vm451 = vcmp.eq.s32.totalorder %v449, 0
    %v452 = vxor.u32 %v447, 2147483648
    %v453 = vsel %vm451, %v446, %v452
    %vm454 = vcmp.eq.s32.totalorder %v449, 2
    %v455 = vxor.u32 %v446, 2147483648
    %v456 = vsel %vm454, %v455, %v447
    %v457 = vsel %vm450, %v453, %v456
    %v458 = vsel %vm448, nan, %v457
    %v459 = vand.u32 2147483647, %v349
    %vm460 = vcmp.le.f32.partialorder %v459, 0.7853982
    %vm461 = vcmp.lt.s32.totalorder %v349, 0
    %v462 = vand.u32 %v349, 2139095040
    %v463 = vshrl.u32 %v462, 23
    %v464 = vsub.s32 %v463, 127
    %v465 = vand.u32 2147483647, %v349
    %v466 = vand.u32 %v465, 8388607
    %v467 = vor.u32 %v466, 8388608
    %v468 = vsub.s32 0, %v467
    %v469 = vadd.s32 %v464, 1
    %vm470 = vcmp.gt.s32.totalorder %v469, 0
    %v471 = vsel %vm470, %v469, 0
    %v472 = vshrl.u32 %v471, 5
    %v473 = vand.u32 %v471, 31
    %v474 = vsub.s32 32, %v473
    %v475 = vshrl.u32 683565275, %v474
    %v476 = vshll.u32 683565275, %v473
    %v477 = vshrl.u32 2475754826, %v474
    %v478 = vor.u32 %v476, %v477
    %v479 = vshll.u32 2475754826, %v473
    %v480 = vshrl.u32 2131351028, %v474
    %v481 = vor.u32 %v479, %v480
    %v482 = vshll.u32 2131351028, %v473
    %v483 = vshrl.u32 2102212464, %v474
    %v484 = vor.u32 %v482, %v483
    %v485 = vshll.u32 2102212464, %v473
    %v486 = vshrl.u32 920167782, %v474
    %v487 = vor.u32 %v485, %v486
    %v488 = vshll.u32 920167782, %v473
    %v489 = vshrl.u32 1326507024, %v474
    %v490 = vor.u32 %v488, %v489
    %vm491 = vcmp.lt.s32.totalorder %v472, 1
    %vm492 = vcmp.lt.s32.totalorder %v472, 2
    %vm493 = vcmp.lt.s32.totalorder %v472, 3
    %vm494 = vcmp.lt.s32.totalorder %v472, 4
    %v495 = vsel %vm491, %v475, %v478
    %v496 = vsel %vm494, %v484, 2102212464
    %v497 = vsel %vm493, %v481, %v496
    %v498 = vsel %vm492, %v495, %v497
    %v499 = vsel %vm491, %v478, %v481
    %v500 = vsel %vm494, %v487, 920167782
    %v501 = vsel %vm493, %v484, %v500
    %v502 = vsel %vm492, %v499, %v501
    %v503 = vsel %vm491, %v481, %v484
    %v504 = vsel %vm494, %v490, 1326507024
    %v505 = vsel %vm493, %v487, %v504
    %v506 = vsel %vm492, %v503, %v505
    %v507 = vshll.u32 %v467, 8
    %v508 = vmul.u32.u64.compose %v507, %v506
    %v509 = vextract.low.u32 %v508
    %v510 = vextract.high.u32 %v508
    %v511 = vmul.u32.u64.compose %v507, %v502
    %v512 = vextract.low.u32 %v511
    %v513 = vextract.high.u32 %v511
    %v514 = vmul.u32 %v507, %v498
    %v515 = vadd.s32 %v510, %v512
    %vm516 = vc.u32 %v510, %v512
    %v517 = vadd.s32 %v513, 1
    %v518 = vsel %vm516, %v517, %v513
    %v519 = vadd.s32 %v514, %v518
    %v520 = vadd.s32 %v519, 536870912
    %v521 = vshrl.u32 %v520, 30
    %v522 = vshll.u32 %v521, 30
    %v523 = vsub.s32 %v519, %v522
    %vm524 = vcmp.lt.s32.totalorder %v523, 0
    %v525 = vsub.s32 0, %v523
    %v526 = vsel %vm524, %v525, %v523
    %v527 = vclz %v526
    %v528 = vsub.s32 %v527, 2
    %vm529 = vcmp.gt.s32.totalorder 0, %v528
    %v530 = vsel %vm529, 0, %v528
    %v531 = vsub.s32 32, %v530
    %v532 = vshll.u32 %v523, %v530
    %v533 = vshrl.u32 %v515, %v531
    %v534 = vor.u32 %v532, %v533
    %v535 = vsub.s32 4294967266, %v530
    %v536 = vadd.s32 %v535, 127
    %v537 = vshll.u32 %v536, 23
    %v538 = vor.u32 4788187, %v537
    %v539 = vand.u32 2147483647, %v538
    %v541 = vcvt.s32.f32 %v534
    %v542 = vmul.f32 %v541, %v539
    %v543 = vxor.u32 %v542, 2147483648
    %v544 = vsel %vm461, %v543, %v542
    %v545 = vsub.s32 4, %v521
    %v546 = vsel %vm461, %v545, %v521
    %v547 = vsel %vm460, %v349, %v544
    %v548 = vsel %vm460, 0, %v546
    %v549 = vcosq.f32.pop %v547
    %v550 = vsinq.f32.pop %v547
    %vm551 = vweird.f32 %v349
    %v552 = vand.u32 %v548, 3
    %vm553 = vcmp.lt.s32.totalorder %v552, 2
    %vm554 = vcmp.eq.s32.totalorder %v552, 0
    %v555 = vxor.u32 %v550, 2147483648
    %v556 = vsel %vm554, %v549, %v555
    %vm557 = vcmp.eq.s32.totalorder %v552, 2
    %v558 = vxor.u32 %v549, 2147483648
    %v559 = vsel %vm557, %v558, %v550
    %v560 = vsel %vm553, %v556, %v559
    %v561 = vsel %vm551, nan, %v560
    %v562 = vand.u32 2147483647, %v350
    %vm563 = vcmp.le.f32.partialorder %v562, 0.7853982
    %vm564 = vcmp.lt.s32.totalorder %v350, 0
    %v565 = vand.u32 %v350, 2139095040
    %v566 = vshrl.u32 %v565, 23
    %v567 = vsub.s32 %v566, 127
    %v568 = vand.u32 2147483647, %v350
    %v569 = vand.u32 %v568, 8388607
    %v570 = vor.u32 %v569, 8388608
    %v571 = vsub.s32 0, %v570
    %v572 = vadd.s32 %v567, 1
    %vm573 = vcmp.gt.s32.totalorder %v572, 0
    %v574 = vsel %vm573, %v572, 0
    %v575 = vshrl.u32 %v574, 5
    %v576 = vand.u32 %v574, 31
    %v577 = vsub.s32 32, %v576
    %v578 = vshrl.u32 683565275, %v577
    %v579 = vshll.u32 683565275, %v576
    %v580 = vshrl.u32 2475754826, %v577
    %v581 = vor.u32 %v579, %v580
    %v582 = vshll.u32 2475754826, %v576
    %v583 = vshrl.u32 2131351028, %v577
    %v584 = vor.u32 %v582, %v583
    %v585 = vshll.u32 2131351028, %v576
    %v586 = vshrl.u32 2102212464, %v577
    %v587 = vor.u32 %v585, %v586
    %v588 = vshll.u32 2102212464, %v576
    %v589 = vshrl.u32 920167782, %v577
    %v590 = vor.u32 %v588, %v589
    %v591 = vshll.u32 920167782, %v576
    %v592 = vshrl.u32 1326507024, %v577
    %v593 = vor.u32 %v591, %v592
    %vm594 = vcmp.lt.s32.totalorder %v575, 1
    %vm595 = vcmp.lt.s32.totalorder %v575, 2
    %vm596 = vcmp.lt.s32.totalorder %v575, 3
    %vm597 = vcmp.lt.s32.totalorder %v575, 4
    %v598 = vsel %vm594, %v578, %v581
    %v599 = vsel %vm597, %v587, 2102212464
    %v600 = vsel %vm596, %v584, %v599
    %v601 = vsel %vm595, %v598, %v600
    %v602 = vsel %vm594, %v581, %v584
    %v603 = vsel %vm597, %v590, 920167782
    %v604 = vsel %vm596, %v587, %v603
    %v605 = vsel %vm595, %v602, %v604
    %v606 = vsel %vm594, %v584, %v587
    %v607 = vsel %vm597, %v593, 1326507024
    %v608 = vsel %vm596, %v590, %v607
    %v609 = vsel %vm595, %v606, %v608
    %v610 = vshll.u32 %v570, 8
    %v611 = vmul.u32.u64.compose %v610, %v609
    %v612 = vextract.low.u32 %v611
    %v613 = vextract.high.u32 %v611
    %v614 = vmul.u32.u64.compose %v610, %v605
    %v615 = vextract.low.u32 %v614
    %v616 = vextract.high.u32 %v614
    %v617 = vmul.u32 %v610, %v601
    %v618 = vadd.s32 %v613, %v615
    %vm619 = vc.u32 %v613, %v615
    %v620 = vadd.s32 %v616, 1
    %v621 = vsel %vm619, %v620, %v616
    %v622 = vadd.s32 %v617, %v621
    %v623 = vadd.s32 %v622, 536870912
    %v624 = vshrl.u32 %v623, 30
    %v625 = vshll.u32 %v624, 30
    %v626 = vsub.s32 %v622, %v625
    %vm627 = vcmp.lt.s32.totalorder %v626, 0
    %v628 = vsub.s32 0, %v626
    %v629 = vsel %vm627, %v628, %v626
    %v630 = vclz %v629
    %v631 = vsub.s32 %v630, 2
    %vm632 = vcmp.gt.s32.totalorder 0, %v631
    %v633 = vsel %vm632, 0, %v631
    %v634 = vsub.s32 32, %v633
    %v635 = vshll.u32 %v626, %v633
    %v636 = vshrl.u32 %v618, %v634
    %v637 = vor.u32 %v635, %v636
    %v638 = vsub.s32 4294967266, %v633
    %v639 = vadd.s32 %v638, 127
    %v640 = vshll.u32 %v639, 23
    %v641 = vor.u32 4788187, %v640
    %v642 = vand.u32 2147483647, %v641
    %v644 = vcvt.s32.f32 %v637
    %v645 = vmul.f32 %v644, %v642
    %v646 = vxor.u32 %v645, 2147483648
    %v647 = vsel %vm564, %v646, %v645
    %v648 = vsub.s32 4, %v624
    %v649 = vsel %vm564, %v648, %v624
    %v650 = vsel %vm563, %v350, %v647
    %v651 = vsel %vm563, 0, %v649
    %v652 = vcosq.f32.pop %v650
    %v653 = vsinq.f32.pop %v650
    %vm654 = vweird.f32 %v350
    %v655 = vand.u32 %v651, 3
    %vm656 = vcmp.lt.s32.totalorder %v655, 2
    %vm657 = vcmp.eq.s32.totalorder %v655, 0
    %v658 = vxor.u32 %v653, 2147483648
    %v659 = vsel %vm657, %v652, %v658
    %vm660 = vcmp.eq.s32.totalorder %v655, 2
    %v661 = vxor.u32 %v652, 2147483648
    %v662 = vsel %vm660, %v661, %v653
    %v663 = vsel %vm656, %v659, %v662
    %v664 = vsel %vm654, nan, %v663
    %v665 = vand.u32 2147483647, %v351
    %vm666 = vcmp.le.f32.partialorder %v665, 0.7853982
    %vm667 = vcmp.lt.s32.totalorder %v351, 0
    %v668 = vand.u32 %v351, 2139095040
    %v669 = vshrl.u32 %v668, 23
    %v670 = vsub.s32 %v669, 127
    %v671 = vand.u32 2147483647, %v351
    %v672 = vand.u32 %v671, 8388607
    %v673 = vor.u32 %v672, 8388608
    %v674 = vsub.s32 0, %v673
    %v675 = vadd.s32 %v670, 1
    %vm676 = vcmp.gt.s32.totalorder %v675, 0
    %v677 = vsel %vm676, %v675, 0
    %v678 = vshrl.u32 %v677, 5
    %v679 = vand.u32 %v677, 31
    %v680 = vsub.s32 32, %v679
    %v681 = vshrl.u32 683565275, %v680
    %v682 = vshll.u32 683565275, %v679
    %v683 = vshrl.u32 2475754826, %v680
    %v684 = vor.u32 %v682, %v683
    %v685 = vshll.u32 2475754826, %v679
    %v686 = vshrl.u32 2131351028, %v680
    %v687 = vor.u32 %v685, %v686
    %v688 = vshll.u32 2131351028, %v679
    %v689 = vshrl.u32 2102212464, %v680
    %v690 = vor.u32 %v688, %v689
    %v691 = vshll.u32 2102212464, %v679
    %v692 = vshrl.u32 920167782, %v680
    %v693 = vor.u32 %v691, %v692
    %v694 = vshll.u32 920167782, %v679
    %v695 = vshrl.u32 1326507024, %v680
    %v696 = vor.u32 %v694, %v695
    %vm697 = vcmp.lt.s32.totalorder %v678, 1
    %vm698 = vcmp.lt.s32.totalorder %v678, 2
    %vm699 = vcmp.lt.s32.totalorder %v678, 3
    %vm700 = vcmp.lt.s32.totalorder %v678, 4
    %v701 = vsel %vm697, %v681, %v684
    %v702 = vsel %vm700, %v690, 2102212464
    %v703 = vsel %vm699, %v687, %v702
    %v704 = vsel %vm698, %v701, %v703
    %v705 = vsel %vm697, %v684, %v687
    %v706 = vsel %vm700, %v693, 920167782
    %v707 = vsel %vm699, %v690, %v706
    %v708 = vsel %vm698, %v705, %v707
    %v709 = vsel %vm697, %v687, %v690
    %v710 = vsel %vm700, %v696, 1326507024
    %v711 = vsel %vm699, %v693, %v710
    %v712 = vsel %vm698, %v709, %v711
    %v713 = vshll.u32 %v673, 8
    %v714 = vmul.u32.u64.compose %v713, %v712
    %v715 = vextract.low.u32 %v714
    %v716 = vextract.high.u32 %v714
    %v717 = vmul.u32.u64.compose %v713, %v708
    %v718 = vextract.low.u32 %v717
    %v719 = vextract.high.u32 %v717
    %v720 = vmul.u32 %v713, %v704
    %v721 = vadd.s32 %v716, %v718
    %vm722 = vc.u32 %v716, %v718
    %v723 = vadd.s32 %v719, 1
    %v724 = vsel %vm722, %v723, %v719
    %v725 = vadd.s32 %v720, %v724
    %v726 = vadd.s32 %v725, 536870912
    %v727 = vshrl.u32 %v726, 30
    %v728 = vshll.u32 %v727, 30
    %v729 = vsub.s32 %v725, %v728
    %vm730 = vcmp.lt.s32.totalorder %v729, 0
    %v731 = vsub.s32 0, %v729
    %v732 = vsel %vm730, %v731, %v729
    %v733 = vclz %v732
    %v734 = vsub.s32 %v733, 2
    %vm735 = vcmp.gt.s32.totalorder 0, %v734
    %v736 = vsel %vm735, 0, %v734
    %v737 = vsub.s32 32, %v736
    %v738 = vshll.u32 %v729, %v736
    %v739 = vshrl.u32 %v721, %v737
    %v740 = vor.u32 %v738, %v739
    %v741 = vsub.s32 4294967266, %v736
    %v742 = vadd.s32 %v741, 127
    %v743 = vshll.u32 %v742, 23
    %v744 = vor.u32 4788187, %v743
    %v745 = vand.u32 2147483647, %v744
    %v747 = vcvt.s32.f32 %v740
    %v748 = vmul.f32 %v747, %v745
    %v749 = vxor.u32 %v748, 2147483648
    %v750 = vsel %vm667, %v749, %v748
    %v751 = vsub.s32 4, %v727
    %v752 = vsel %vm667, %v751, %v727
    %v753 = vsel %vm666, %v351, %v750
    %v754 = vsel %vm666, 0, %v752
    %v755 = vcosq.f32.pop %v753
    %v756 = vsinq.f32.pop %v753
    %vm757 = vweird.f32 %v351
    %v758 = vand.u32 %v754, 3
    %vm759 = vcmp.lt.s32.totalorder %v758, 2
    %vm760 = vcmp.eq.s32.totalorder %v758, 0
    %v761 = vxor.u32 %v756, 2147483648
    %v762 = vsel %vm760, %v755, %v761
    %vm763 = vcmp.eq.s32.totalorder %v758, 2
    %v764 = vxor.u32 %v755, 2147483648
    %v765 = vsel %vm763, %v764, %v756
    %v766 = vsel %vm759, %v762, %v765
    %v767 = vsel %vm757, nan, %v766
    %v768 = vand.u32 2147483647, %v352
    %vm769 = vcmp.le.f32.partialorder %v768, 0.7853982
    %vm770 = vcmp.lt.s32.totalorder %v352, 0
    %v771 = vand.u32 %v352, 2139095040
    %v772 = vshrl.u32 %v771, 23
    %v773 = vsub.s32 %v772, 127
    %v774 = vand.u32 2147483647, %v352
    %v775 = vand.u32 %v774, 8388607
    %v776 = vor.u32 %v775, 8388608
    %v777 = vsub.s32 0, %v776
    %v778 = vadd.s32 %v773, 1
    %vm779 = vcmp.gt.s32.totalorder %v778, 0
    %v780 = vsel %vm779, %v778, 0
    %v781 = vshrl.u32 %v780, 5
    %v782 = vand.u32 %v780, 31
    %v783 = vsub.s32 32, %v782
    %v784 = vshrl.u32 683565275, %v783
    %v785 = vshll.u32 683565275, %v782
    %v786 = vshrl.u32 2475754826, %v783
    %v787 = vor.u32 %v785, %v786
    %v788 = vshll.u32 2475754826, %v782
    %v789 = vshrl.u32 2131351028, %v783
    %v790 = vor.u32 %v788, %v789
    %v791 = vshll.u32 2131351028, %v782
    %v792 = vshrl.u32 2102212464, %v783
    %v793 = vor.u32 %v791, %v792
    %v794 = vshll.u32 2102212464, %v782
    %v795 = vshrl.u32 920167782, %v783
    %v796 = vor.u32 %v794, %v795
    %v797 = vshll.u32 920167782, %v782
    %v798 = vshrl.u32 1326507024, %v783
    %v799 = vor.u32 %v797, %v798
    %vm800 = vcmp.lt.s32.totalorder %v781, 1
    %vm801 = vcmp.lt.s32.totalorder %v781, 2
    %vm802 = vcmp.lt.s32.totalorder %v781, 3
    %vm803 = vcmp.lt.s32.totalorder %v781, 4
    %v804 = vsel %vm800, %v784, %v787
    %v805 = vsel %vm803, %v793, 2102212464
    %v806 = vsel %vm802, %v790, %v805
    %v807 = vsel %vm801, %v804, %v806
    %v808 = vsel %vm800, %v787, %v790
    %v809 = vsel %vm803, %v796, 920167782
    %v810 = vsel %vm802, %v793, %v809
    %v811 = vsel %vm801, %v808, %v810
    %v812 = vsel %vm800, %v790, %v793
    %v813 = vsel %vm803, %v799, 1326507024
    %v814 = vsel %vm802, %v796, %v813
    %v815 = vsel %vm801, %v812, %v814
    %v816 = vshll.u32 %v776, 8
    %v817 = vmul.u32.u64.compose %v816, %v815
    %v818 = vextract.low.u32 %v817
    %v819 = vextract.high.u32 %v817
    %v820 = vmul.u32.u64.compose %v816, %v811
    %v821 = vextract.low.u32 %v820
    %v822 = vextract.high.u32 %v820
    %v823 = vmul.u32 %v816, %v807
    %v824 = vadd.s32 %v819, %v821
    %vm825 = vc.u32 %v819, %v821
    %v826 = vadd.s32 %v822, 1
    %v827 = vsel %vm825, %v826, %v822
    %v828 = vadd.s32 %v823, %v827
    %v829 = vadd.s32 %v828, 536870912
    %v830 = vshrl.u32 %v829, 30
    %v831 = vshll.u32 %v830, 30
    %v832 = vsub.s32 %v828, %v831
    %vm833 = vcmp.lt.s32.totalorder %v832, 0
    %v834 = vsub.s32 0, %v832
    %v835 = vsel %vm833, %v834, %v832
    %v836 = vclz %v835
    %v837 = vsub.s32 %v836, 2
    %vm838 = vcmp.gt.s32.totalorder 0, %v837
    %v839 = vsel %vm838, 0, %v837
    %v840 = vsub.s32 32, %v839
    %v841 = vshll.u32 %v832, %v839
    %v842 = vshrl.u32 %v824, %v840
    %v843 = vor.u32 %v841, %v842
    %v844 = vsub.s32 4294967266, %v839
    %v845 = vadd.s32 %v844, 127
    %v846 = vshll.u32 %v845, 23
    %v847 = vor.u32 4788187, %v846
    %v848 = vand.u32 2147483647, %v847
    %v850 = vcvt.s32.f32 %v843
    %v851 = vmul.f32 %v850, %v848
    %v852 = vxor.u32 %v851, 2147483648
    %v853 = vsel %vm770, %v852, %v851
    %v854 = vsub.s32 4, %v830
    %v855 = vsel %vm770, %v854, %v830
    %v856 = vsel %vm769, %v352, %v853
    %v857 = vsel %vm769, 0, %v855
    %v858 = vcosq.f32.pop %v856
    %v859 = vsinq.f32.pop %v856
    %vm860 = vweird.f32 %v352
    %v861 = vand.u32 %v857, 3
    %vm862 = vcmp.lt.s32.totalorder %v861, 2
    %vm863 = vcmp.eq.s32.totalorder %v861, 0
    %v864 = vxor.u32 %v859, 2147483648
    %v865 = vsel %vm863, %v858, %v864
    %vm866 = vcmp.eq.s32.totalorder %v861, 2
    %v867 = vxor.u32 %v858, 2147483648
    %v868 = vsel %vm866, %v867, %v859
    %v869 = vsel %vm862, %v865, %v868
    %v870 = vsel %vm860, nan, %v869
    %v871 = vand.u32 2147483647, %v353
    %vm872 = vcmp.le.f32.partialorder %v871, 0.7853982
    %vm873 = vcmp.lt.s32.totalorder %v353, 0
    %v874 = vand.u32 %v353, 2139095040
    %v875 = vshrl.u32 %v874, 23
    %v876 = vsub.s32 %v875, 127
    %v877 = vand.u32 2147483647, %v353
    %v878 = vand.u32 %v877, 8388607
    %v879 = vor.u32 %v878, 8388608
    %v880 = vsub.s32 0, %v879
    %v881 = vadd.s32 %v876, 1
    %vm882 = vcmp.gt.s32.totalorder %v881, 0
    %v883 = vsel %vm882, %v881, 0
    %v884 = vshrl.u32 %v883, 5
    %v885 = vand.u32 %v883, 31
    %v886 = vsub.s32 32, %v885
    %v887 = vshrl.u32 683565275, %v886
    %v888 = vshll.u32 683565275, %v885
    %v889 = vshrl.u32 2475754826, %v886
    %v890 = vor.u32 %v888, %v889
    %v891 = vshll.u32 2475754826, %v885
    %v892 = vshrl.u32 2131351028, %v886
    %v893 = vor.u32 %v891, %v892
    %v894 = vshll.u32 2131351028, %v885
    %v895 = vshrl.u32 2102212464, %v886
    %v896 = vor.u32 %v894, %v895
    %v897 = vshll.u32 2102212464, %v885
    %v898 = vshrl.u32 920167782, %v886
    %v899 = vor.u32 %v897, %v898
    %v900 = vshll.u32 920167782, %v885
    %v901 = vshrl.u32 1326507024, %v886
    %v902 = vor.u32 %v900, %v901
    %vm903 = vcmp.lt.s32.totalorder %v884, 1
    %vm904 = vcmp.lt.s32.totalorder %v884, 2
    %vm905 = vcmp.lt.s32.totalorder %v884, 3
    %vm906 = vcmp.lt.s32.totalorder %v884, 4
    %v907 = vsel %vm903, %v887, %v890
    %v908 = vsel %vm906, %v896, 2102212464
    %v909 = vsel %vm905, %v893, %v908
    %v910 = vsel %vm904, %v907, %v909
    %v911 = vsel %vm903, %v890, %v893
    %v912 = vsel %vm906, %v899, 920167782
    %v913 = vsel %vm905, %v896, %v912
    %v914 = vsel %vm904, %v911, %v913
    %v915 = vsel %vm903, %v893, %v896
    %v916 = vsel %vm906, %v902, 1326507024
    %v917 = vsel %vm905, %v899, %v916
    %v918 = vsel %vm904, %v915, %v917
    %v919 = vshll.u32 %v879, 8
    %v920 = vmul.u32.u64.compose %v919, %v918
    %v921 = vextract.low.u32 %v920
    %v922 = vextract.high.u32 %v920
    %v923 = vmul.u32.u64.compose %v919, %v914
    %v924 = vextract.low.u32 %v923
    %v925 = vextract.high.u32 %v923
    %v926 = vmul.u32 %v919, %v910
    %v927 = vadd.s32 %v922, %v924
    %vm928 = vc.u32 %v922, %v924
    %v929 = vadd.s32 %v925, 1
    %v930 = vsel %vm928, %v929, %v925
    %v931 = vadd.s32 %v926, %v930
    %v932 = vadd.s32 %v931, 536870912
    %v933 = vshrl.u32 %v932, 30
    %v934 = vshll.u32 %v933, 30
    %v935 = vsub.s32 %v931, %v934
    %vm936 = vcmp.lt.s32.totalorder %v935, 0
    %v937 = vsub.s32 0, %v935
    %v938 = vsel %vm936, %v937, %v935
    %v939 = vclz %v938
    %v940 = vsub.s32 %v939, 2
    %vm941 = vcmp.gt.s32.totalorder 0, %v940
    %v942 = vsel %vm941, 0, %v940
    %v943 = vsub.s32 32, %v942
    %v944 = vshll.u32 %v935, %v942
    %v945 = vshrl.u32 %v927, %v943
    %v946 = vor.u32 %v944, %v945
    %v947 = vsub.s32 4294967266, %v942
    %v948 = vadd.s32 %v947, 127
    %v949 = vshll.u32 %v948, 23
    %v950 = vor.u32 4788187, %v949
    %v951 = vand.u32 2147483647, %v950
    %v953 = vcvt.s32.f32 %v946
    %v954 = vmul.f32 %v953, %v951
    %v955 = vxor.u32 %v954, 2147483648
    %v956 = vsel %vm873, %v955, %v954
    %v957 = vsub.s32 4, %v933
    %v958 = vsel %vm873, %v957, %v933
    %v959 = vsel %vm872, %v353, %v956
    %v960 = vsel %vm872, 0, %v958
    %v961 = vcosq.f32.pop %v959
    %v962 = vsinq.f32.pop %v959
    %vm963 = vweird.f32 %v353
    %v964 = vand.u32 %v960, 3
    %vm965 = vcmp.lt.s32.totalorder %v964, 2
    %vm966 = vcmp.eq.s32.totalorder %v964, 0
    %v967 = vxor.u32 %v962, 2147483648
    %v968 = vsel %vm966, %v961, %v967
    %vm969 = vcmp.eq.s32.totalorder %v964, 2
    %v970 = vxor.u32 %v961, 2147483648
    %v971 = vsel %vm969, %v970, %v962
    %v972 = vsel %vm965, %v968, %v971
    %v973 = vsel %vm963, nan, %v972
    %v974 = vand.u32 2147483647, %v354
    %vm975 = vcmp.le.f32.partialorder %v974, 0.7853982
    %vm976 = vcmp.lt.s32.totalorder %v354, 0
    %v977 = vand.u32 %v354, 2139095040
    %v978 = vshrl.u32 %v977, 23
    %v979 = vsub.s32 %v978, 127
    %v980 = vand.u32 2147483647, %v354
    %v981 = vand.u32 %v980, 8388607
    %v982 = vor.u32 %v981, 8388608
    %v983 = vsub.s32 0, %v982
    %v984 = vadd.s32 %v979, 1
    %vm985 = vcmp.gt.s32.totalorder %v984, 0
    %v986 = vsel %vm985, %v984, 0
    %v987 = vshrl.u32 %v986, 5
    %v988 = vand.u32 %v986, 31
    %v989 = vsub.s32 32, %v988
    %v990 = vshrl.u32 683565275, %v989
    %v991 = vshll.u32 683565275, %v988
    %v992 = vshrl.u32 2475754826, %v989
    %v993 = vor.u32 %v991, %v992
    %v994 = vshll.u32 2475754826, %v988
    %v995 = vshrl.u32 2131351028, %v989
    %v996 = vor.u32 %v994, %v995
    %v997 = vshll.u32 2131351028, %v988
    %v998 = vshrl.u32 2102212464, %v989
    %v999 = vor.u32 %v997, %v998
    %v1000 = vshll.u32 2102212464, %v988
    %v1001 = vshrl.u32 920167782, %v989
    %v1002 = vor.u32 %v1000, %v1001
    %v1003 = vshll.u32 920167782, %v988
    %v1004 = vshrl.u32 1326507024, %v989
    %v1005 = vor.u32 %v1003, %v1004
    %vm1006 = vcmp.lt.s32.totalorder %v987, 1
    %vm1007 = vcmp.lt.s32.totalorder %v987, 2
    %vm1008 = vcmp.lt.s32.totalorder %v987, 3
    %vm1009 = vcmp.lt.s32.totalorder %v987, 4
    %v1010 = vsel %vm1006, %v990, %v993
    %v1011 = vsel %vm1009, %v999, 2102212464
    %v1012 = vsel %vm1008, %v996, %v1011
    %v1013 = vsel %vm1007, %v1010, %v1012
    %v1014 = vsel %vm1006, %v993, %v996
    %v1015 = vsel %vm1009, %v1002, 920167782
    %v1016 = vsel %vm1008, %v999, %v1015
    %v1017 = vsel %vm1007, %v1014, %v1016
    %v1018 = vsel %vm1006, %v996, %v999
    %v1019 = vsel %vm1009, %v1005, 1326507024
    %v1020 = vsel %vm1008, %v1002, %v1019
    %v1021 = vsel %vm1007, %v1018, %v1020
    %v1022 = vshll.u32 %v982, 8
    %v1023 = vmul.u32.u64.compose %v1022, %v1021
    %v1024 = vextract.low.u32 %v1023
    %v1025 = vextract.high.u32 %v1023
    %v1026 = vmul.u32.u64.compose %v1022, %v1017
    %v1027 = vextract.low.u32 %v1026
    %v1028 = vextract.high.u32 %v1026
    %v1029 = vmul.u32 %v1022, %v1013
    %v1030 = vadd.s32 %v1025, %v1027
    %vm1031 = vc.u32 %v1025, %v1027
    %v1032 = vadd.s32 %v1028, 1
    %v1033 = vsel %vm1031, %v1032, %v1028
    %v1034 = vadd.s32 %v1029, %v1033
    %v1035 = vadd.s32 %v1034, 536870912
    %v1036 = vshrl.u32 %v1035, 30
    %v1037 = vshll.u32 %v1036, 30
    %v1038 = vsub.s32 %v1034, %v1037
    %vm1039 = vcmp.lt.s32.totalorder %v1038, 0
    %v1040 = vsub.s32 0, %v1038
    %v1041 = vsel %vm1039, %v1040, %v1038
    %v1042 = vclz %v1041
    %v1043 = vsub.s32 %v1042, 2
    %vm1044 = vcmp.gt.s32.totalorder 0, %v1043
    %v1045 = vsel %vm1044, 0, %v1043
    %v1046 = vsub.s32 32, %v1045
    %v1047 = vshll.u32 %v1038, %v1045
    %v1048 = vshrl.u32 %v1030, %v1046
    %v1049 = vor.u32 %v1047, %v1048
    %v1050 = vsub.s32 4294967266, %v1045
    %v1051 = vadd.s32 %v1050, 127
    %v1052 = vshll.u32 %v1051, 23
    %v1053 = vor.u32 4788187, %v1052
    %v1054 = vand.u32 2147483647, %v1053
    %v1056 = vcvt.s32.f32 %v1049
    %v1057 = vmul.f32 %v1056, %v1054
    %v1058 = vxor.u32 %v1057, 2147483648
    %v1059 = vsel %vm976, %v1058, %v1057
    %v1060 = vsub.s32 4, %v1036
    %v1061 = vsel %vm976, %v1060, %v1036
    %v1062 = vsel %vm975, %v354, %v1059
    %v1063 = vsel %vm975, 0, %v1061
    %v1064 = vcosq.f32.pop %v1062
    %v1065 = vsinq.f32.pop %v1062
    %vm1066 = vweird.f32 %v354
    %v1067 = vand.u32 %v1063, 3
    %vm1068 = vcmp.lt.s32.totalorder %v1067, 2
    %vm1069 = vcmp.eq.s32.totalorder %v1067, 0
    %v1070 = vxor.u32 %v1065, 2147483648
    %v1071 = vsel %vm1069, %v1064, %v1070
    %vm1072 = vcmp.eq.s32.totalorder %v1067, 2
    %v1073 = vxor.u32 %v1064, 2147483648
    %v1074 = vsel %vm1072, %v1073, %v1065
    %v1075 = vsel %vm1068, %v1071, %v1074
    %v1076 = vsel %vm1066, nan, %v1075
    %v1077 = vand.u32 2147483647, %v355
    %vm1078 = vcmp.le.f32.partialorder %v1077, 0.7853982
    %vm1079 = vcmp.lt.s32.totalorder %v355, 0
    %v1080 = vand.u32 %v355, 2139095040
    %v1081 = vshrl.u32 %v1080, 23
    %v1082 = vsub.s32 %v1081, 127
    %v1083 = vand.u32 2147483647, %v355
    %v1084 = vand.u32 %v1083, 8388607
    %v1085 = vor.u32 %v1084, 8388608
    %v1086 = vsub.s32 0, %v1085
    %v1087 = vadd.s32 %v1082, 1
    %vm1088 = vcmp.gt.s32.totalorder %v1087, 0
    %v1089 = vsel %vm1088, %v1087, 0
    %v1090 = vshrl.u32 %v1089, 5
    %v1091 = vand.u32 %v1089, 31
    %v1092 = vsub.s32 32, %v1091
    %v1093 = vshrl.u32 683565275, %v1092
    %v1094 = vshll.u32 683565275, %v1091
    %v1095 = vshrl.u32 2475754826, %v1092
    %v1096 = vor.u32 %v1094, %v1095
    %v1097 = vshll.u32 2475754826, %v1091
    %v1098 = vshrl.u32 2131351028, %v1092
    %v1099 = vor.u32 %v1097, %v1098
    %v1100 = vshll.u32 2131351028, %v1091
    %v1101 = vshrl.u32 2102212464, %v1092
    %v1102 = vor.u32 %v1100, %v1101
    %v1103 = vshll.u32 2102212464, %v1091
    %v1104 = vshrl.u32 920167782, %v1092
    %v1105 = vor.u32 %v1103, %v1104
    %v1106 = vshll.u32 920167782, %v1091
    %v1107 = vshrl.u32 1326507024, %v1092
    %v1108 = vor.u32 %v1106, %v1107
    %vm1109 = vcmp.lt.s32.totalorder %v1090, 1
    %vm1110 = vcmp.lt.s32.totalorder %v1090, 2
    %vm1111 = vcmp.lt.s32.totalorder %v1090, 3
    %vm1112 = vcmp.lt.s32.totalorder %v1090, 4
    %v1113 = vsel %vm1109, %v1093, %v1096
    %v1114 = vsel %vm1112, %v1102, 2102212464
    %v1115 = vsel %vm1111, %v1099, %v1114
    %v1116 = vsel %vm1110, %v1113, %v1115
    %v1117 = vsel %vm1109, %v1096, %v1099
    %v1118 = vsel %vm1112, %v1105, 920167782
    %v1119 = vsel %vm1111, %v1102, %v1118
    %v1120 = vsel %vm1110, %v1117, %v1119
    %v1121 = vsel %vm1109, %v1099, %v1102
    %v1122 = vsel %vm1112, %v1108, 1326507024
    %v1123 = vsel %vm1111, %v1105, %v1122
    %v1124 = vsel %vm1110, %v1121, %v1123
    %v1125 = vshll.u32 %v1085, 8
    %v1126 = vmul.u32.u64.compose %v1125, %v1124
    %v1127 = vextract.low.u32 %v1126
    %v1128 = vextract.high.u32 %v1126
    %v1129 = vmul.u32.u64.compose %v1125, %v1120
    %v1130 = vextract.low.u32 %v1129
    %v1131 = vextract.high.u32 %v1129
    %v1132 = vmul.u32 %v1125, %v1116
    %v1133 = vadd.s32 %v1128, %v1130
    %vm1134 = vc.u32 %v1128, %v1130
    %v1135 = vadd.s32 %v1131, 1
    %v1136 = vsel %vm1134, %v1135, %v1131
    %v1137 = vadd.s32 %v1132, %v1136
    %v1138 = vadd.s32 %v1137, 536870912
    %v1139 = vshrl.u32 %v1138, 30
    %v1140 = vshll.u32 %v1139, 30
    %v1141 = vsub.s32 %v1137, %v1140
    %vm1142 = vcmp.lt.s32.totalorder %v1141, 0
    %v1143 = vsub.s32 0, %v1141
    %v1144 = vsel %vm1142, %v1143, %v1141
    %v1145 = vclz %v1144
    %v1146 = vsub.s32 %v1145, 2
    %vm1147 = vcmp.gt.s32.totalorder 0, %v1146
    %v1148 = vsel %vm1147, 0, %v1146
    %v1149 = vsub.s32 32, %v1148
    %v1150 = vshll.u32 %v1141, %v1148
    %v1151 = vshrl.u32 %v1133, %v1149
    %v1152 = vor.u32 %v1150, %v1151
    %v1153 = vsub.s32 4294967266, %v1148
    %v1154 = vadd.s32 %v1153, 127
    %v1155 = vshll.u32 %v1154, 23
    %v1156 = vor.u32 4788187, %v1155
    %v1157 = vand.u32 2147483647, %v1156
    %v1159 = vcvt.s32.f32 %v1152
    %v1160 = vmul.f32 %v1159, %v1157
    %v1161 = vxor.u32 %v1160, 2147483648
    %v1162 = vsel %vm1079, %v1161, %v1160
    %v1163 = vsub.s32 4, %v1139
    %v1164 = vsel %vm1079, %v1163, %v1139
    %v1165 = vsel %vm1078, %v355, %v1162
    %v1166 = vsel %vm1078, 0, %v1164
    %v1167 = vcosq.f32.pop %v1165
    %v1168 = vsinq.f32.pop %v1165
    %vm1169 = vweird.f32 %v355
    %v1170 = vand.u32 %v1166, 3
    %vm1171 = vcmp.lt.s32.totalorder %v1170, 2
    %vm1172 = vcmp.eq.s32.totalorder %v1170, 0
    %v1173 = vxor.u32 %v1168, 2147483648
    %v1174 = vsel %vm1172, %v1167, %v1173
    %vm1175 = vcmp.eq.s32.totalorder %v1170, 2
    %v1176 = vxor.u32 %v1167, 2147483648
    %v1177 = vsel %vm1175, %v1176, %v1168
    %v1178 = vsel %vm1171, %v1174, %v1177
    %v1179 = vsel %vm1169, nan, %v1178
    %v1180 = vmul.f32 %v298, %v458
    %v1181 = vmul.f32 %v305, %v561
    %v1182 = vmul.f32 %v312, %v664
    %v1183 = vmul.f32 %v319, %v767
    %v1184 = vmul.f32 %v326, %v870
    %v1185 = vmul.f32 %v333, %v973
    %v1186 = vmul.f32 %v340, %v1076
    %v1187 = vmul.f32 %v347, %v1179
    %1188 = vst [vmem:[#allocation3] sm:$0xff] %v1180
    %1189 = vst [vmem:[#allocation3 + $0x8] sm:$0xff] %v1181
    %1190 = vst [vmem:[#allocation3 + $0x10] sm:$0xff] %v1182
    %1191 = vst [vmem:[#allocation3 + $0x18] sm:$0xff] %v1183
    %1192 = vst [vmem:[#allocation3 + $0x20] sm:$0xff] %v1184
    %1193 = vst [vmem:[#allocation3 + $0x28] sm:$0xff] %v1185
    %1194 = vst [vmem:[#allocation3 + $0x30] sm:$0xff] %v1186
    %1195 = vst [vmem:[#allocation3 + $0x38] sm:$0xff] %v1187
    %v1196 = vand.u32 2147483647, %v348
    %vm1197 = vcmp.le.f32.partialorder %v1196, 0.7853982
    %vm1198 = vcmp.lt.s32.totalorder %v348, 0
    %v1199 = vand.u32 %v348, 2139095040
    %v1200 = vshrl.u32 %v1199, 23
    %v1201 = vsub.s32 %v1200, 127
    %v1202 = vand.u32 2147483647, %v348
    %v1203 = vand.u32 %v1202, 8388607
    %v1204 = vor.u32 %v1203, 8388608
    %v1205 = vsub.s32 0, %v1204
    %v1206 = vadd.s32 %v1201, 1
    %vm1207 = vcmp.gt.s32.totalorder %v1206, 0
    %v1208 = vsel %vm1207, %v1206, 0
    %v1209 = vshrl.u32 %v1208, 5
    %v1210 = vand.u32 %v1208, 31
    %v1211 = vsub.s32 32, %v1210
    %v1212 = vshrl.u32 683565275, %v1211
    %v1213 = vshll.u32 683565275, %v1210
    %v1214 = vshrl.u32 2475754826, %v1211
    %v1215 = vor.u32 %v1213, %v1214
    %v1216 = vshll.u32 2475754826, %v1210
    %v1217 = vshrl.u32 2131351028, %v1211
    %v1218 = vor.u32 %v1216, %v1217
    %v1219 = vshll.u32 2131351028, %v1210
    %v1220 = vshrl.u32 2102212464, %v1211
    %v1221 = vor.u32 %v1219, %v1220
    %v1222 = vshll.u32 2102212464, %v1210
    %v1223 = vshrl.u32 920167782, %v1211
    %v1224 = vor.u32 %v1222, %v1223
    %v1225 = vshll.u32 920167782, %v1210
    %v1226 = vshrl.u32 1326507024, %v1211
    %v1227 = vor.u32 %v1225, %v1226
    %vm1228 = vcmp.lt.s32.totalorder %v1209, 1
    %vm1229 = vcmp.lt.s32.totalorder %v1209, 2
    %vm1230 = vcmp.lt.s32.totalorder %v1209, 3
    %vm1231 = vcmp.lt.s32.totalorder %v1209, 4
    %v1232 = vsel %vm1228, %v1212, %v1215
    %v1233 = vsel %vm1231, %v1221, 2102212464
    %v1234 = vsel %vm1230, %v1218, %v1233
    %v1235 = vsel %vm1229, %v1232, %v1234
    %v1236 = vsel %vm1228, %v1215, %v1218
    %v1237 = vsel %vm1231, %v1224, 920167782
    %v1238 = vsel %vm1230, %v1221, %v1237
    %v1239 = vsel %vm1229, %v1236, %v1238
    %v1240 = vsel %vm1228, %v1218, %v1221
    %v1241 = vsel %vm1231, %v1227, 1326507024
    %v1242 = vsel %vm1230, %v1224, %v1241
    %v1243 = vsel %vm1229, %v1240, %v1242
    %v1244 = vshll.u32 %v1204, 8
    %v1245 = vmul.u32.u64.compose %v1244, %v1243
    %v1246 = vextract.low.u32 %v1245
    %v1247 = vextract.high.u32 %v1245
    %v1248 = vmul.u32.u64.compose %v1244, %v1239
    %v1249 = vextract.low.u32 %v1248
    %v1250 = vextract.high.u32 %v1248
    %v1251 = vmul.u32 %v1244, %v1235
    %v1252 = vadd.s32 %v1247, %v1249
    %vm1253 = vc.u32 %v1247, %v1249
    %v1254 = vadd.s32 %v1250, 1
    %v1255 = vsel %vm1253, %v1254, %v1250
    %v1256 = vadd.s32 %v1251, %v1255
    %v1257 = vadd.s32 %v1256, 536870912
    %v1258 = vshrl.u32 %v1257, 30
    %v1259 = vshll.u32 %v1258, 30
    %v1260 = vsub.s32 %v1256, %v1259
    %vm1261 = vcmp.lt.s32.totalorder %v1260, 0
    %v1262 = vsub.s32 0, %v1260
    %v1263 = vsel %vm1261, %v1262, %v1260
    %v1264 = vclz %v1263
    %v1265 = vsub.s32 %v1264, 2
    %vm1266 = vcmp.gt.s32.totalorder 0, %v1265
    %v1267 = vsel %vm1266, 0, %v1265
    %v1268 = vsub.s32 32, %v1267
    %v1269 = vshll.u32 %v1260, %v1267
    %v1270 = vshrl.u32 %v1252, %v1268
    %v1271 = vor.u32 %v1269, %v1270
    %v1272 = vsub.s32 4294967266, %v1267
    %v1273 = vadd.s32 %v1272, 127
    %v1274 = vshll.u32 %v1273, 23
    %v1275 = vor.u32 4788187, %v1274
    %v1276 = vand.u32 2147483647, %v1275
    %v1278 = vcvt.s32.f32 %v1271
    %v1279 = vmul.f32 %v1278, %v1276
    %v1280 = vxor.u32 %v1279, 2147483648
    %v1281 = vsel %vm1198, %v1280, %v1279
    %v1282 = vsub.s32 4, %v1258
    %v1283 = vsel %vm1198, %v1282, %v1258
    %v1284 = vsel %vm1197, %v348, %v1281
    %v1285 = vsel %vm1197, 0, %v1283
    %v1286 = vcosq.f32.pop %v1284
    %v1287 = vsinq.f32.pop %v1284
    %vm1288 = vweird.f32 %v348
    %v1289 = vadd.s32 %v1285, 3
    %v1290 = vand.u32 %v1289, 3
    %vm1291 = vcmp.lt.s32.totalorder %v1290, 2
    %vm1292 = vcmp.eq.s32.totalorder %v1290, 0
    %v1293 = vxor.u32 %v1287, 2147483648
    %v1294 = vsel %vm1292, %v1286, %v1293
    %vm1295 = vcmp.eq.s32.totalorder %v1290, 2
    %v1296 = vxor.u32 %v1286, 2147483648
    %v1297 = vsel %vm1295, %v1296, %v1287
    %v1298 = vsel %vm1291, %v1294, %v1297
    %v1299 = vsel %vm1288, nan, %v1298
    %v1300 = vand.u32 2147483647, %v349
    %vm1301 = vcmp.le.f32.partialorder %v1300, 0.7853982
    %vm1302 = vcmp.lt.s32.totalorder %v349, 0
    %v1303 = vand.u32 %v349, 2139095040
    %v1304 = vshrl.u32 %v1303, 23
    %v1305 = vsub.s32 %v1304, 127
    %v1306 = vand.u32 2147483647, %v349
    %v1307 = vand.u32 %v1306, 8388607
    %v1308 = vor.u32 %v1307, 8388608
    %v1309 = vsub.s32 0, %v1308
    %v1310 = vadd.s32 %v1305, 1
    %vm1311 = vcmp.gt.s32.totalorder %v1310, 0
    %v1312 = vsel %vm1311, %v1310, 0
    %v1313 = vshrl.u32 %v1312, 5
    %v1314 = vand.u32 %v1312, 31
    %v1315 = vsub.s32 32, %v1314
    %v1316 = vshrl.u32 683565275, %v1315
    %v1317 = vshll.u32 683565275, %v1314
    %v1318 = vshrl.u32 2475754826, %v1315
    %v1319 = vor.u32 %v1317, %v1318
    %v1320 = vshll.u32 2475754826, %v1314
    %v1321 = vshrl.u32 2131351028, %v1315
    %v1322 = vor.u32 %v1320, %v1321
    %v1323 = vshll.u32 2131351028, %v1314
    %v1324 = vshrl.u32 2102212464, %v1315
    %v1325 = vor.u32 %v1323, %v1324
    %v1326 = vshll.u32 2102212464, %v1314
    %v1327 = vshrl.u32 920167782, %v1315
    %v1328 = vor.u32 %v1326, %v1327
    %v1329 = vshll.u32 920167782, %v1314
    %v1330 = vshrl.u32 1326507024, %v1315
    %v1331 = vor.u32 %v1329, %v1330
    %vm1332 = vcmp.lt.s32.totalorder %v1313, 1
    %vm1333 = vcmp.lt.s32.totalorder %v1313, 2
    %vm1334 = vcmp.lt.s32.totalorder %v1313, 3
    %vm1335 = vcmp.lt.s32.totalorder %v1313, 4
    %v1336 = vsel %vm1332, %v1316, %v1319
    %v1337 = vsel %vm1335, %v1325, 2102212464
    %v1338 = vsel %vm1334, %v1322, %v1337
    %v1339 = vsel %vm1333, %v1336, %v1338
    %v1340 = vsel %vm1332, %v1319, %v1322
    %v1341 = vsel %vm1335, %v1328, 920167782
    %v1342 = vsel %vm1334, %v1325, %v1341
    %v1343 = vsel %vm1333, %v1340, %v1342
    %v1344 = vsel %vm1332, %v1322, %v1325
    %v1345 = vsel %vm1335, %v1331, 1326507024
    %v1346 = vsel %vm1334, %v1328, %v1345
    %v1347 = vsel %vm1333, %v1344, %v1346
    %v1348 = vshll.u32 %v1308, 8
    %v1349 = vmul.u32.u64.compose %v1348, %v1347
    %v1350 = vextract.low.u32 %v1349
    %v1351 = vextract.high.u32 %v1349
    %v1352 = vmul.u32.u64.compose %v1348, %v1343
    %v1353 = vextract.low.u32 %v1352
    %v1354 = vextract.high.u32 %v1352
    %v1355 = vmul.u32 %v1348, %v1339
    %v1356 = vadd.s32 %v1351, %v1353
    %vm1357 = vc.u32 %v1351, %v1353
    %v1358 = vadd.s32 %v1354, 1
    %v1359 = vsel %vm1357, %v1358, %v1354
    %v1360 = vadd.s32 %v1355, %v1359
    %v1361 = vadd.s32 %v1360, 536870912
    %v1362 = vshrl.u32 %v1361, 30
    %v1363 = vshll.u32 %v1362, 30
    %v1364 = vsub.s32 %v1360, %v1363
    %vm1365 = vcmp.lt.s32.totalorder %v1364, 0
    %v1366 = vsub.s32 0, %v1364
    %v1367 = vsel %vm1365, %v1366, %v1364
    %v1368 = vclz %v1367
    %v1369 = vsub.s32 %v1368, 2
    %vm1370 = vcmp.gt.s32.totalorder 0, %v1369
    %v1371 = vsel %vm1370, 0, %v1369
    %v1372 = vsub.s32 32, %v1371
    %v1373 = vshll.u32 %v1364, %v1371
    %v1374 = vshrl.u32 %v1356, %v1372
    %v1375 = vor.u32 %v1373, %v1374
    %v1376 = vsub.s32 4294967266, %v1371
    %v1377 = vadd.s32 %v1376, 127
    %v1378 = vshll.u32 %v1377, 23
    %v1379 = vor.u32 4788187, %v1378
    %v1380 = vand.u32 2147483647, %v1379
    %v1382 = vcvt.s32.f32 %v1375
    %v1383 = vmul.f32 %v1382, %v1380
    %v1384 = vxor.u32 %v1383, 2147483648
    %v1385 = vsel %vm1302, %v1384, %v1383
    %v1386 = vsub.s32 4, %v1362
    %v1387 = vsel %vm1302, %v1386, %v1362
    %v1388 = vsel %vm1301, %v349, %v1385
    %v1389 = vsel %vm1301, 0, %v1387
    %v1390 = vcosq.f32.pop %v1388
    %v1391 = vsinq.f32.pop %v1388
    %vm1392 = vweird.f32 %v349
    %v1393 = vadd.s32 %v1389, 3
    %v1394 = vand.u32 %v1393, 3
    %vm1395 = vcmp.lt.s32.totalorder %v1394, 2
    %vm1396 = vcmp.eq.s32.totalorder %v1394, 0
    %v1397 = vxor.u32 %v1391, 2147483648
    %v1398 = vsel %vm1396, %v1390, %v1397
    %vm1399 = vcmp.eq.s32.totalorder %v1394, 2
    %v1400 = vxor.u32 %v1390, 2147483648
    %v1401 = vsel %vm1399, %v1400, %v1391
    %v1402 = vsel %vm1395, %v1398, %v1401
    %v1403 = vsel %vm1392, nan, %v1402
    %v1404 = vand.u32 2147483647, %v350
    %vm1405 = vcmp.le.f32.partialorder %v1404, 0.7853982
    %vm1406 = vcmp.lt.s32.totalorder %v350, 0
    %v1407 = vand.u32 %v350, 2139095040
    %v1408 = vshrl.u32 %v1407, 23
    %v1409 = vsub.s32 %v1408, 127
    %v1410 = vand.u32 2147483647, %v350
    %v1411 = vand.u32 %v1410, 8388607
    %v1412 = vor.u32 %v1411, 8388608
    %v1413 = vsub.s32 0, %v1412
    %v1414 = vadd.s32 %v1409, 1
    %vm1415 = vcmp.gt.s32.totalorder %v1414, 0
    %v1416 = vsel %vm1415, %v1414, 0
    %v1417 = vshrl.u32 %v1416, 5
    %v1418 = vand.u32 %v1416, 31
    %v1419 = vsub.s32 32, %v1418
    %v1420 = vshrl.u32 683565275, %v1419
    %v1421 = vshll.u32 683565275, %v1418
    %v1422 = vshrl.u32 2475754826, %v1419
    %v1423 = vor.u32 %v1421, %v1422
    %v1424 = vshll.u32 2475754826, %v1418
    %v1425 = vshrl.u32 2131351028, %v1419
    %v1426 = vor.u32 %v1424, %v1425
    %v1427 = vshll.u32 2131351028, %v1418
    %v1428 = vshrl.u32 2102212464, %v1419
    %v1429 = vor.u32 %v1427, %v1428
    %v1430 = vshll.u32 2102212464, %v1418
    %v1431 = vshrl.u32 920167782, %v1419
    %v1432 = vor.u32 %v1430, %v1431
    %v1433 = vshll.u32 920167782, %v1418
    %v1434 = vshrl.u32 1326507024, %v1419
    %v1435 = vor.u32 %v1433, %v1434
    %vm1436 = vcmp.lt.s32.totalorder %v1417, 1
    %vm1437 = vcmp.lt.s32.totalorder %v1417, 2
    %vm1438 = vcmp.lt.s32.totalorder %v1417, 3
    %vm1439 = vcmp.lt.s32.totalorder %v1417, 4
    %v1440 = vsel %vm1436, %v1420, %v1423
    %v1441 = vsel %vm1439, %v1429, 2102212464
    %v1442 = vsel %vm1438, %v1426, %v1441
    %v1443 = vsel %vm1437, %v1440, %v1442
    %v1444 = vsel %vm1436, %v1423, %v1426
    %v1445 = vsel %vm1439, %v1432, 920167782
    %v1446 = vsel %vm1438, %v1429, %v1445
    %v1447 = vsel %vm1437, %v1444, %v1446
    %v1448 = vsel %vm1436, %v1426, %v1429
    %v1449 = vsel %vm1439, %v1435, 1326507024
    %v1450 = vsel %vm1438, %v1432, %v1449
    %v1451 = vsel %vm1437, %v1448, %v1450
    %v1452 = vshll.u32 %v1412, 8
    %v1453 = vmul.u32.u64.compose %v1452, %v1451
    %v1454 = vextract.low.u32 %v1453
    %v1455 = vextract.high.u32 %v1453
    %v1456 = vmul.u32.u64.compose %v1452, %v1447
    %v1457 = vextract.low.u32 %v1456
    %v1458 = vextract.high.u32 %v1456
    %v1459 = vmul.u32 %v1452, %v1443
    %v1460 = vadd.s32 %v1455, %v1457
    %vm1461 = vc.u32 %v1455, %v1457
    %v1462 = vadd.s32 %v1458, 1
    %v1463 = vsel %vm1461, %v1462, %v1458
    %v1464 = vadd.s32 %v1459, %v1463
    %v1465 = vadd.s32 %v1464, 536870912
    %v1466 = vshrl.u32 %v1465, 30
    %v1467 = vshll.u32 %v1466, 30
    %v1468 = vsub.s32 %v1464, %v1467
    %vm1469 = vcmp.lt.s32.totalorder %v1468, 0
    %v1470 = vsub.s32 0, %v1468
    %v1471 = vsel %vm1469, %v1470, %v1468
    %v1472 = vclz %v1471
    %v1473 = vsub.s32 %v1472, 2
    %vm1474 = vcmp.gt.s32.totalorder 0, %v1473
    %v1475 = vsel %vm1474, 0, %v1473
    %v1476 = vsub.s32 32, %v1475
    %v1477 = vshll.u32 %v1468, %v1475
    %v1478 = vshrl.u32 %v1460, %v1476
    %v1479 = vor.u32 %v1477, %v1478
    %v1480 = vsub.s32 4294967266, %v1475
    %v1481 = vadd.s32 %v1480, 127
    %v1482 = vshll.u32 %v1481, 23
    %v1483 = vor.u32 4788187, %v1482
    %v1484 = vand.u32 2147483647, %v1483
    %v1486 = vcvt.s32.f32 %v1479
    %v1487 = vmul.f32 %v1486, %v1484
    %v1488 = vxor.u32 %v1487, 2147483648
    %v1489 = vsel %vm1406, %v1488, %v1487
    %v1490 = vsub.s32 4, %v1466
    %v1491 = vsel %vm1406, %v1490, %v1466
    %v1492 = vsel %vm1405, %v350, %v1489
    %v1493 = vsel %vm1405, 0, %v1491
    %v1494 = vcosq.f32.pop %v1492
    %v1495 = vsinq.f32.pop %v1492
    %vm1496 = vweird.f32 %v350
    %v1497 = vadd.s32 %v1493, 3
    %v1498 = vand.u32 %v1497, 3
    %vm1499 = vcmp.lt.s32.totalorder %v1498, 2
    %vm1500 = vcmp.eq.s32.totalorder %v1498, 0
    %v1501 = vxor.u32 %v1495, 2147483648
    %v1502 = vsel %vm1500, %v1494, %v1501
    %vm1503 = vcmp.eq.s32.totalorder %v1498, 2
    %v1504 = vxor.u32 %v1494, 2147483648
    %v1505 = vsel %vm1503, %v1504, %v1495
    %v1506 = vsel %vm1499, %v1502, %v1505
    %v1507 = vsel %vm1496, nan, %v1506
    %v1508 = vand.u32 2147483647, %v351
    %vm1509 = vcmp.le.f32.partialorder %v1508, 0.7853982
    %vm1510 = vcmp.lt.s32.totalorder %v351, 0
    %v1511 = vand.u32 %v351, 2139095040
    %v1512 = vshrl.u32 %v1511, 23
    %v1513 = vsub.s32 %v1512, 127
    %v1514 = vand.u32 2147483647, %v351
    %v1515 = vand.u32 %v1514, 8388607
    %v1516 = vor.u32 %v1515, 8388608
    %v1517 = vsub.s32 0, %v1516
    %v1518 = vadd.s32 %v1513, 1
    %vm1519 = vcmp.gt.s32.totalorder %v1518, 0
    %v1520 = vsel %vm1519, %v1518, 0
    %v1521 = vshrl.u32 %v1520, 5
    %v1522 = vand.u32 %v1520, 31
    %v1523 = vsub.s32 32, %v1522
    %v1524 = vshrl.u32 683565275, %v1523
    %v1525 = vshll.u32 683565275, %v1522
    %v1526 = vshrl.u32 2475754826, %v1523
    %v1527 = vor.u32 %v1525, %v1526
    %v1528 = vshll.u32 2475754826, %v1522
    %v1529 = vshrl.u32 2131351028, %v1523
    %v1530 = vor.u32 %v1528, %v1529
    %v1531 = vshll.u32 2131351028, %v1522
    %v1532 = vshrl.u32 2102212464, %v1523
    %v1533 = vor.u32 %v1531, %v1532
    %v1534 = vshll.u32 2102212464, %v1522
    %v1535 = vshrl.u32 920167782, %v1523
    %v1536 = vor.u32 %v1534, %v1535
    %v1537 = vshll.u32 920167782, %v1522
    %v1538 = vshrl.u32 1326507024, %v1523
    %v1539 = vor.u32 %v1537, %v1538
    %vm1540 = vcmp.lt.s32.totalorder %v1521, 1
    %vm1541 = vcmp.lt.s32.totalorder %v1521, 2
    %vm1542 = vcmp.lt.s32.totalorder %v1521, 3
    %vm1543 = vcmp.lt.s32.totalorder %v1521, 4
    %v1544 = vsel %vm1540, %v1524, %v1527
    %v1545 = vsel %vm1543, %v1533, 2102212464
    %v1546 = vsel %vm1542, %v1530, %v1545
    %v1547 = vsel %vm1541, %v1544, %v1546
    %v1548 = vsel %vm1540, %v1527, %v1530
    %v1549 = vsel %vm1543, %v1536, 920167782
    %v1550 = vsel %vm1542, %v1533, %v1549
    %v1551 = vsel %vm1541, %v1548, %v1550
    %v1552 = vsel %vm1540, %v1530, %v1533
    %v1553 = vsel %vm1543, %v1539, 1326507024
    %v1554 = vsel %vm1542, %v1536, %v1553
    %v1555 = vsel %vm1541, %v1552, %v1554
    %v1556 = vshll.u32 %v1516, 8
    %v1557 = vmul.u32.u64.compose %v1556, %v1555
    %v1558 = vextract.low.u32 %v1557
    %v1559 = vextract.high.u32 %v1557
    %v1560 = vmul.u32.u64.compose %v1556, %v1551
    %v1561 = vextract.low.u32 %v1560
    %v1562 = vextract.high.u32 %v1560
    %v1563 = vmul.u32 %v1556, %v1547
    %v1564 = vadd.s32 %v1559, %v1561
    %vm1565 = vc.u32 %v1559, %v1561
    %v1566 = vadd.s32 %v1562, 1
    %v1567 = vsel %vm1565, %v1566, %v1562
    %v1568 = vadd.s32 %v1563, %v1567
    %v1569 = vadd.s32 %v1568, 536870912
    %v1570 = vshrl.u32 %v1569, 30
    %v1571 = vshll.u32 %v1570, 30
    %v1572 = vsub.s32 %v1568, %v1571
    %vm1573 = vcmp.lt.s32.totalorder %v1572, 0
    %v1574 = vsub.s32 0, %v1572
    %v1575 = vsel %vm1573, %v1574, %v1572
    %v1576 = vclz %v1575
    %v1577 = vsub.s32 %v1576, 2
    %vm1578 = vcmp.gt.s32.totalorder 0, %v1577
    %v1579 = vsel %vm1578, 0, %v1577
    %v1580 = vsub.s32 32, %v1579
    %v1581 = vshll.u32 %v1572, %v1579
    %v1582 = vshrl.u32 %v1564, %v1580
    %v1583 = vor.u32 %v1581, %v1582
    %v1584 = vsub.s32 4294967266, %v1579
    %v1585 = vadd.s32 %v1584, 127
    %v1586 = vshll.u32 %v1585, 23
    %v1587 = vor.u32 4788187, %v1586
    %v1588 = vand.u32 2147483647, %v1587
    %v1590 = vcvt.s32.f32 %v1583
    %v1591 = vmul.f32 %v1590, %v1588
    %v1592 = vxor.u32 %v1591, 2147483648
    %v1593 = vsel %vm1510, %v1592, %v1591
    %v1594 = vsub.s32 4, %v1570
    %v1595 = vsel %vm1510, %v1594, %v1570
    %v1596 = vsel %vm1509, %v351, %v1593
    %v1597 = vsel %vm1509, 0, %v1595
    %v1598 = vcosq.f32.pop %v1596
    %v1599 = vsinq.f32.pop %v1596
    %vm1600 = vweird.f32 %v351
    %v1601 = vadd.s32 %v1597, 3
    %v1602 = vand.u32 %v1601, 3
    %vm1603 = vcmp.lt.s32.totalorder %v1602, 2
    %vm1604 = vcmp.eq.s32.totalorder %v1602, 0
    %v1605 = vxor.u32 %v1599, 2147483648
    %v1606 = vsel %vm1604, %v1598, %v1605
    %vm1607 = vcmp.eq.s32.totalorder %v1602, 2
    %v1608 = vxor.u32 %v1598, 2147483648
    %v1609 = vsel %vm1607, %v1608, %v1599
    %v1610 = vsel %vm1603, %v1606, %v1609
    %v1611 = vsel %vm1600, nan, %v1610
    %v1612 = vand.u32 2147483647, %v352
    %vm1613 = vcmp.le.f32.partialorder %v1612, 0.7853982
    %vm1614 = vcmp.lt.s32.totalorder %v352, 0
    %v1615 = vand.u32 %v352, 2139095040
    %v1616 = vshrl.u32 %v1615, 23
    %v1617 = vsub.s32 %v1616, 127
    %v1618 = vand.u32 2147483647, %v352
    %v1619 = vand.u32 %v1618, 8388607
    %v1620 = vor.u32 %v1619, 8388608
    %v1621 = vsub.s32 0, %v1620
    %v1622 = vadd.s32 %v1617, 1
    %vm1623 = vcmp.gt.s32.totalorder %v1622, 0
    %v1624 = vsel %vm1623, %v1622, 0
    %v1625 = vshrl.u32 %v1624, 5
    %v1626 = vand.u32 %v1624, 31
    %v1627 = vsub.s32 32, %v1626
    %v1628 = vshrl.u32 683565275, %v1627
    %v1629 = vshll.u32 683565275, %v1626
    %v1630 = vshrl.u32 2475754826, %v1627
    %v1631 = vor.u32 %v1629, %v1630
    %v1632 = vshll.u32 2475754826, %v1626
    %v1633 = vshrl.u32 2131351028, %v1627
    %v1634 = vor.u32 %v1632, %v1633
    %v1635 = vshll.u32 2131351028, %v1626
    %v1636 = vshrl.u32 2102212464, %v1627
    %v1637 = vor.u32 %v1635, %v1636
    %v1638 = vshll.u32 2102212464, %v1626
    %v1639 = vshrl.u32 920167782, %v1627
    %v1640 = vor.u32 %v1638, %v1639
    %v1641 = vshll.u32 920167782, %v1626
    %v1642 = vshrl.u32 1326507024, %v1627
    %v1643 = vor.u32 %v1641, %v1642
    %vm1644 = vcmp.lt.s32.totalorder %v1625, 1
    %vm1645 = vcmp.lt.s32.totalorder %v1625, 2
    %vm1646 = vcmp.lt.s32.totalorder %v1625, 3
    %vm1647 = vcmp.lt.s32.totalorder %v1625, 4
    %v1648 = vsel %vm1644, %v1628, %v1631
    %v1649 = vsel %vm1647, %v1637, 2102212464
    %v1650 = vsel %vm1646, %v1634, %v1649
    %v1651 = vsel %vm1645, %v1648, %v1650
    %v1652 = vsel %vm1644, %v1631, %v1634
    %v1653 = vsel %vm1647, %v1640, 920167782
    %v1654 = vsel %vm1646, %v1637, %v1653
    %v1655 = vsel %vm1645, %v1652, %v1654
    %v1656 = vsel %vm1644, %v1634, %v1637
    %v1657 = vsel %vm1647, %v1643, 1326507024
    %v1658 = vsel %vm1646, %v1640, %v1657
    %v1659 = vsel %vm1645, %v1656, %v1658
    %v1660 = vshll.u32 %v1620, 8
    %v1661 = vmul.u32.u64.compose %v1660, %v1659
    %v1662 = vextract.low.u32 %v1661
    %v1663 = vextract.high.u32 %v1661
    %v1664 = vmul.u32.u64.compose %v1660, %v1655
    %v1665 = vextract.low.u32 %v1664
    %v1666 = vextract.high.u32 %v1664
    %v1667 = vmul.u32 %v1660, %v1651
    %v1668 = vadd.s32 %v1663, %v1665
    %vm1669 = vc.u32 %v1663, %v1665
    %v1670 = vadd.s32 %v1666, 1
    %v1671 = vsel %vm1669, %v1670, %v1666
    %v1672 = vadd.s32 %v1667, %v1671
    %v1673 = vadd.s32 %v1672, 536870912
    %v1674 = vshrl.u32 %v1673, 30
    %v1675 = vshll.u32 %v1674, 30
    %v1676 = vsub.s32 %v1672, %v1675
    %vm1677 = vcmp.lt.s32.totalorder %v1676, 0
    %v1678 = vsub.s32 0, %v1676
    %v1679 = vsel %vm1677, %v1678, %v1676
    %v1680 = vclz %v1679
    %v1681 = vsub.s32 %v1680, 2
    %vm1682 = vcmp.gt.s32.totalorder 0, %v1681
    %v1683 = vsel %vm1682, 0, %v1681
    %v1684 = vsub.s32 32, %v1683
    %v1685 = vshll.u32 %v1676, %v1683
    %v1686 = vshrl.u32 %v1668, %v1684
    %v1687 = vor.u32 %v1685, %v1686
    %v1688 = vsub.s32 4294967266, %v1683
    %v1689 = vadd.s32 %v1688, 127
    %v1690 = vshll.u32 %v1689, 23
    %v1691 = vor.u32 4788187, %v1690
    %v1692 = vand.u32 2147483647, %v1691
    %v1694 = vcvt.s32.f32 %v1687
    %v1695 = vmul.f32 %v1694, %v1692
    %v1696 = vxor.u32 %v1695, 2147483648
    %v1697 = vsel %vm1614, %v1696, %v1695
    %v1698 = vsub.s32 4, %v1674
    %v1699 = vsel %vm1614, %v1698, %v1674
    %v1700 = vsel %vm1613, %v352, %v1697
    %v1701 = vsel %vm1613, 0, %v1699
    %v1702 = vcosq.f32.pop %v1700
    %v1703 = vsinq.f32.pop %v1700
    %vm1704 = vweird.f32 %v352
    %v1705 = vadd.s32 %v1701, 3
    %v1706 = vand.u32 %v1705, 3
    %vm1707 = vcmp.lt.s32.totalorder %v1706, 2
    %vm1708 = vcmp.eq.s32.totalorder %v1706, 0
    %v1709 = vxor.u32 %v1703, 2147483648
    %v1710 = vsel %vm1708, %v1702, %v1709
    %vm1711 = vcmp.eq.s32.totalorder %v1706, 2
    %v1712 = vxor.u32 %v1702, 2147483648
    %v1713 = vsel %vm1711, %v1712, %v1703
    %v1714 = vsel %vm1707, %v1710, %v1713
    %v1715 = vsel %vm1704, nan, %v1714
    %v1716 = vand.u32 2147483647, %v353
    %vm1717 = vcmp.le.f32.partialorder %v1716, 0.7853982
    %vm1718 = vcmp.lt.s32.totalorder %v353, 0
    %v1719 = vand.u32 %v353, 2139095040
    %v1720 = vshrl.u32 %v1719, 23
    %v1721 = vsub.s32 %v1720, 127
    %v1722 = vand.u32 2147483647, %v353
    %v1723 = vand.u32 %v1722, 8388607
    %v1724 = vor.u32 %v1723, 8388608
    %v1725 = vsub.s32 0, %v1724
    %v1726 = vadd.s32 %v1721, 1
    %vm1727 = vcmp.gt.s32.totalorder %v1726, 0
    %v1728 = vsel %vm1727, %v1726, 0
    %v1729 = vshrl.u32 %v1728, 5
    %v1730 = vand.u32 %v1728, 31
    %v1731 = vsub.s32 32, %v1730
    %v1732 = vshrl.u32 683565275, %v1731
    %v1733 = vshll.u32 683565275, %v1730
    %v1734 = vshrl.u32 2475754826, %v1731
    %v1735 = vor.u32 %v1733, %v1734
    %v1736 = vshll.u32 2475754826, %v1730
    %v1737 = vshrl.u32 2131351028, %v1731
    %v1738 = vor.u32 %v1736, %v1737
    %v1739 = vshll.u32 2131351028, %v1730
    %v1740 = vshrl.u32 2102212464, %v1731
    %v1741 = vor.u32 %v1739, %v1740
    %v1742 = vshll.u32 2102212464, %v1730
    %v1743 = vshrl.u32 920167782, %v1731
    %v1744 = vor.u32 %v1742, %v1743
    %v1745 = vshll.u32 920167782, %v1730
    %v1746 = vshrl.u32 1326507024, %v1731
    %v1747 = vor.u32 %v1745, %v1746
    %vm1748 = vcmp.lt.s32.totalorder %v1729, 1
    %vm1749 = vcmp.lt.s32.totalorder %v1729, 2
    %vm1750 = vcmp.lt.s32.totalorder %v1729, 3
    %vm1751 = vcmp.lt.s32.totalorder %v1729, 4
    %v1752 = vsel %vm1748, %v1732, %v1735
    %v1753 = vsel %vm1751, %v1741, 2102212464
    %v1754 = vsel %vm1750, %v1738, %v1753
    %v1755 = vsel %vm1749, %v1752, %v1754
    %v1756 = vsel %vm1748, %v1735, %v1738
    %v1757 = vsel %vm1751, %v1744, 920167782
    %v1758 = vsel %vm1750, %v1741, %v1757
    %v1759 = vsel %vm1749, %v1756, %v1758
    %v1760 = vsel %vm1748, %v1738, %v1741
    %v1761 = vsel %vm1751, %v1747, 1326507024
    %v1762 = vsel %vm1750, %v1744, %v1761
    %v1763 = vsel %vm1749, %v1760, %v1762
    %v1764 = vshll.u32 %v1724, 8
    %v1765 = vmul.u32.u64.compose %v1764, %v1763
    %v1766 = vextract.low.u32 %v1765
    %v1767 = vextract.high.u32 %v1765
    %v1768 = vmul.u32.u64.compose %v1764, %v1759
    %v1769 = vextract.low.u32 %v1768
    %v1770 = vextract.high.u32 %v1768
    %v1771 = vmul.u32 %v1764, %v1755
    %v1772 = vadd.s32 %v1767, %v1769
    %vm1773 = vc.u32 %v1767, %v1769
    %v1774 = vadd.s32 %v1770, 1
    %v1775 = vsel %vm1773, %v1774, %v1770
    %v1776 = vadd.s32 %v1771, %v1775
    %v1777 = vadd.s32 %v1776, 536870912
    %v1778 = vshrl.u32 %v1777, 30
    %v1779 = vshll.u32 %v1778, 30
    %v1780 = vsub.s32 %v1776, %v1779
    %vm1781 = vcmp.lt.s32.totalorder %v1780, 0
    %v1782 = vsub.s32 0, %v1780
    %v1783 = vsel %vm1781, %v1782, %v1780
    %v1784 = vclz %v1783
    %v1785 = vsub.s32 %v1784, 2
    %vm1786 = vcmp.gt.s32.totalorder 0, %v1785
    %v1787 = vsel %vm1786, 0, %v1785
    %v1788 = vsub.s32 32, %v1787
    %v1789 = vshll.u32 %v1780, %v1787
    %v1790 = vshrl.u32 %v1772, %v1788
    %v1791 = vor.u32 %v1789, %v1790
    %v1792 = vsub.s32 4294967266, %v1787
    %v1793 = vadd.s32 %v1792, 127
    %v1794 = vshll.u32 %v1793, 23
    %v1795 = vor.u32 4788187, %v1794
    %v1796 = vand.u32 2147483647, %v1795
    %v1798 = vcvt.s32.f32 %v1791
    %v1799 = vmul.f32 %v1798, %v1796
    %v1800 = vxor.u32 %v1799, 2147483648
    %v1801 = vsel %vm1718, %v1800, %v1799
    %v1802 = vsub.s32 4, %v1778
    %v1803 = vsel %vm1718, %v1802, %v1778
    %v1804 = vsel %vm1717, %v353, %v1801
    %v1805 = vsel %vm1717, 0, %v1803
    %v1806 = vcosq.f32.pop %v1804
    %v1807 = vsinq.f32.pop %v1804
    %vm1808 = vweird.f32 %v353
    %v1809 = vadd.s32 %v1805, 3
    %v1810 = vand.u32 %v1809, 3
    %vm1811 = vcmp.lt.s32.totalorder %v1810, 2
    %vm1812 = vcmp.eq.s32.totalorder %v1810, 0
    %v1813 = vxor.u32 %v1807, 2147483648
    %v1814 = vsel %vm1812, %v1806, %v1813
    %vm1815 = vcmp.eq.s32.totalorder %v1810, 2
    %v1816 = vxor.u32 %v1806, 2147483648
    %v1817 = vsel %vm1815, %v1816, %v1807
    %v1818 = vsel %vm1811, %v1814, %v1817
    %v1819 = vsel %vm1808, nan, %v1818
    %v1820 = vand.u32 2147483647, %v354
    %vm1821 = vcmp.le.f32.partialorder %v1820, 0.7853982
    %vm1822 = vcmp.lt.s32.totalorder %v354, 0
    %v1823 = vand.u32 %v354, 2139095040
    %v1824 = vshrl.u32 %v1823, 23
    %v1825 = vsub.s32 %v1824, 127
    %v1826 = vand.u32 2147483647, %v354
    %v1827 = vand.u32 %v1826, 8388607
    %v1828 = vor.u32 %v1827, 8388608
    %v1829 = vsub.s32 0, %v1828
    %v1830 = vadd.s32 %v1825, 1
    %vm1831 = vcmp.gt.s32.totalorder %v1830, 0
    %v1832 = vsel %vm1831, %v1830, 0
    %v1833 = vshrl.u32 %v1832, 5
    %v1834 = vand.u32 %v1832, 31
    %v1835 = vsub.s32 32, %v1834
    %v1836 = vshrl.u32 683565275, %v1835
    %v1837 = vshll.u32 683565275, %v1834
    %v1838 = vshrl.u32 2475754826, %v1835
    %v1839 = vor.u32 %v1837, %v1838
    %v1840 = vshll.u32 2475754826, %v1834
    %v1841 = vshrl.u32 2131351028, %v1835
    %v1842 = vor.u32 %v1840, %v1841
    %v1843 = vshll.u32 2131351028, %v1834
    %v1844 = vshrl.u32 2102212464, %v1835
    %v1845 = vor.u32 %v1843, %v1844
    %v1846 = vshll.u32 2102212464, %v1834
    %v1847 = vshrl.u32 920167782, %v1835
    %v1848 = vor.u32 %v1846, %v1847
    %v1849 = vshll.u32 920167782, %v1834
    %v1850 = vshrl.u32 1326507024, %v1835
    %v1851 = vor.u32 %v1849, %v1850
    %vm1852 = vcmp.lt.s32.totalorder %v1833, 1
    %vm1853 = vcmp.lt.s32.totalorder %v1833, 2
    %vm1854 = vcmp.lt.s32.totalorder %v1833, 3
    %vm1855 = vcmp.lt.s32.totalorder %v1833, 4
    %v1856 = vsel %vm1852, %v1836, %v1839
    %v1857 = vsel %vm1855, %v1845, 2102212464
    %v1858 = vsel %vm1854, %v1842, %v1857
    %v1859 = vsel %vm1853, %v1856, %v1858
    %v1860 = vsel %vm1852, %v1839, %v1842
    %v1861 = vsel %vm1855, %v1848, 920167782
    %v1862 = vsel %vm1854, %v1845, %v1861
    %v1863 = vsel %vm1853, %v1860, %v1862
    %v1864 = vsel %vm1852, %v1842, %v1845
    %v1865 = vsel %vm1855, %v1851, 1326507024
    %v1866 = vsel %vm1854, %v1848, %v1865
    %v1867 = vsel %vm1853, %v1864, %v1866
    %v1868 = vshll.u32 %v1828, 8
    %v1869 = vmul.u32.u64.compose %v1868, %v1867
    %v1870 = vextract.low.u32 %v1869
    %v1871 = vextract.high.u32 %v1869
    %v1872 = vmul.u32.u64.compose %v1868, %v1863
    %v1873 = vextract.low.u32 %v1872
    %v1874 = vextract.high.u32 %v1872
    %v1875 = vmul.u32 %v1868, %v1859
    %v1876 = vadd.s32 %v1871, %v1873
    %vm1877 = vc.u32 %v1871, %v1873
    %v1878 = vadd.s32 %v1874, 1
    %v1879 = vsel %vm1877, %v1878, %v1874
    %v1880 = vadd.s32 %v1875, %v1879
    %v1881 = vadd.s32 %v1880, 536870912
    %v1882 = vshrl.u32 %v1881, 30
    %v1883 = vshll.u32 %v1882, 30
    %v1884 = vsub.s32 %v1880, %v1883
    %vm1885 = vcmp.lt.s32.totalorder %v1884, 0
    %v1886 = vsub.s32 0, %v1884
    %v1887 = vsel %vm1885, %v1886, %v1884
    %v1888 = vclz %v1887
    %v1889 = vsub.s32 %v1888, 2
    %vm1890 = vcmp.gt.s32.totalorder 0, %v1889
    %v1891 = vsel %vm1890, 0, %v1889
    %v1892 = vsub.s32 32, %v1891
    %v1893 = vshll.u32 %v1884, %v1891
    %v1894 = vshrl.u32 %v1876, %v1892
    %v1895 = vor.u32 %v1893, %v1894
    %v1896 = vsub.s32 4294967266, %v1891
    %v1897 = vadd.s32 %v1896, 127
    %v1898 = vshll.u32 %v1897, 23
    %v1899 = vor.u32 4788187, %v1898
    %v1900 = vand.u32 2147483647, %v1899
    %v1902 = vcvt.s32.f32 %v1895
    %v1903 = vmul.f32 %v1902, %v1900
    %v1904 = vxor.u32 %v1903, 2147483648
    %v1905 = vsel %vm1822, %v1904, %v1903
    %v1906 = vsub.s32 4, %v1882
    %v1907 = vsel %vm1822, %v1906, %v1882
    %v1908 = vsel %vm1821, %v354, %v1905
    %v1909 = vsel %vm1821, 0, %v1907
    %v1910 = vcosq.f32.pop %v1908
    %v1911 = vsinq.f32.pop %v1908
    %vm1912 = vweird.f32 %v354
    %v1913 = vadd.s32 %v1909, 3
    %v1914 = vand.u32 %v1913, 3
    %vm1915 = vcmp.lt.s32.totalorder %v1914, 2
    %vm1916 = vcmp.eq.s32.totalorder %v1914, 0
    %v1917 = vxor.u32 %v1911, 2147483648
    %v1918 = vsel %vm1916, %v1910, %v1917
    %vm1919 = vcmp.eq.s32.totalorder %v1914, 2
    %v1920 = vxor.u32 %v1910, 2147483648
    %v1921 = vsel %vm1919, %v1920, %v1911
    %v1922 = vsel %vm1915, %v1918, %v1921
    %v1923 = vsel %vm1912, nan, %v1922
    %v1924 = vand.u32 2147483647, %v355
    %vm1925 = vcmp.le.f32.partialorder %v1924, 0.7853982
    %vm1926 = vcmp.lt.s32.totalorder %v355, 0
    %v1927 = vand.u32 %v355, 2139095040
    %v1928 = vshrl.u32 %v1927, 23
    %v1929 = vsub.s32 %v1928, 127
    %v1930 = vand.u32 2147483647, %v355
    %v1931 = vand.u32 %v1930, 8388607
    %v1932 = vor.u32 %v1931, 8388608
    %v1933 = vsub.s32 0, %v1932
    %v1934 = vadd.s32 %v1929, 1
    %vm1935 = vcmp.gt.s32.totalorder %v1934, 0
    %v1936 = vsel %vm1935, %v1934, 0
    %v1937 = vshrl.u32 %v1936, 5
    %v1938 = vand.u32 %v1936, 31
    %v1939 = vsub.s32 32, %v1938
    %v1940 = vshrl.u32 683565275, %v1939
    %v1941 = vshll.u32 683565275, %v1938
    %v1942 = vshrl.u32 2475754826, %v1939
    %v1943 = vor.u32 %v1941, %v1942
    %v1944 = vshll.u32 2475754826, %v1938
    %v1945 = vshrl.u32 2131351028, %v1939
    %v1946 = vor.u32 %v1944, %v1945
    %v1947 = vshll.u32 2131351028, %v1938
    %v1948 = vshrl.u32 2102212464, %v1939
    %v1949 = vor.u32 %v1947, %v1948
    %v1950 = vshll.u32 2102212464, %v1938
    %v1951 = vshrl.u32 920167782, %v1939
    %v1952 = vor.u32 %v1950, %v1951
    %v1953 = vshll.u32 920167782, %v1938
    %v1954 = vshrl.u32 1326507024, %v1939
    %v1955 = vor.u32 %v1953, %v1954
    %vm1956 = vcmp.lt.s32.totalorder %v1937, 1
    %vm1957 = vcmp.lt.s32.totalorder %v1937, 2
    %vm1958 = vcmp.lt.s32.totalorder %v1937, 3
    %vm1959 = vcmp.lt.s32.totalorder %v1937, 4
    %v1960 = vsel %vm1956, %v1940, %v1943
    %v1961 = vsel %vm1959, %v1949, 2102212464
    %v1962 = vsel %vm1958, %v1946, %v1961
    %v1963 = vsel %vm1957, %v1960, %v1962
    %v1964 = vsel %vm1956, %v1943, %v1946
    %v1965 = vsel %vm1959, %v1952, 920167782
    %v1966 = vsel %vm1958, %v1949, %v1965
    %v1967 = vsel %vm1957, %v1964, %v1966
    %v1968 = vsel %vm1956, %v1946, %v1949
    %v1969 = vsel %vm1959, %v1955, 1326507024
    %v1970 = vsel %vm1958, %v1952, %v1969
    %v1971 = vsel %vm1957, %v1968, %v1970
    %v1972 = vshll.u32 %v1932, 8
    %v1973 = vmul.u32.u64.compose %v1972, %v1971
    %v1974 = vextract.low.u32 %v1973
    %v1975 = vextract.high.u32 %v1973
    %v1976 = vmul.u32.u64.compose %v1972, %v1967
    %v1977 = vextract.low.u32 %v1976
    %v1978 = vextract.high.u32 %v1976
    %v1979 = vmul.u32 %v1972, %v1963
    %v1980 = vadd.s32 %v1975, %v1977
    %vm1981 = vc.u32 %v1975, %v1977
    %v1982 = vadd.s32 %v1978, 1
    %v1983 = vsel %vm1981, %v1982, %v1978
    %v1984 = vadd.s32 %v1979, %v1983
    %v1985 = vadd.s32 %v1984, 536870912
    %v1986 = vshrl.u32 %v1985, 30
    %v1987 = vshll.u32 %v1986, 30
    %v1988 = vsub.s32 %v1984, %v1987
    %vm1989 = vcmp.lt.s32.totalorder %v1988, 0
    %v1990 = vsub.s32 0, %v1988
    %v1991 = vsel %vm1989, %v1990, %v1988
    %v1992 = vclz %v1991
    %v1993 = vsub.s32 %v1992, 2
    %vm1994 = vcmp.gt.s32.totalorder 0, %v1993
    %v1995 = vsel %vm1994, 0, %v1993
    %v1996 = vsub.s32 32, %v1995
    %v1997 = vshll.u32 %v1988, %v1995
    %v1998 = vshrl.u32 %v1980, %v1996
    %v1999 = vor.u32 %v1997, %v1998
    %v2000 = vsub.s32 4294967266, %v1995
    %v2001 = vadd.s32 %v2000, 127
    %v2002 = vshll.u32 %v2001, 23
    %v2003 = vor.u32 4788187, %v2002
    %v2004 = vand.u32 2147483647, %v2003
    %v2006 = vcvt.s32.f32 %v1999
    %v2007 = vmul.f32 %v2006, %v2004
    %v2008 = vxor.u32 %v2007, 2147483648
    %v2009 = vsel %vm1926, %v2008, %v2007
    %v2010 = vsub.s32 4, %v1986
    %v2011 = vsel %vm1926, %v2010, %v1986
    %v2012 = vsel %vm1925, %v355, %v2009
    %v2013 = vsel %vm1925, 0, %v2011
    %v2014 = vcosq.f32.pop %v2012
    %v2015 = vsinq.f32.pop %v2012
    %vm2016 = vweird.f32 %v355
    %v2017 = vadd.s32 %v2013, 3
    %v2018 = vand.u32 %v2017, 3
    %vm2019 = vcmp.lt.s32.totalorder %v2018, 2
    %vm2020 = vcmp.eq.s32.totalorder %v2018, 0
    %v2021 = vxor.u32 %v2015, 2147483648
    %v2022 = vsel %vm2020, %v2014, %v2021
    %vm2023 = vcmp.eq.s32.totalorder %v2018, 2
    %v2024 = vxor.u32 %v2014, 2147483648
    %v2025 = vsel %vm2023, %v2024, %v2015
    %v2026 = vsel %vm2019, %v2022, %v2025
    %v2027 = vsel %vm2016, nan, %v2026
    %v2028 = vmul.f32 %v298, %v1299
    %v2029 = vmul.f32 %v305, %v1403
    %v2030 = vmul.f32 %v312, %v1507
    %v2031 = vmul.f32 %v319, %v1611
    %v2032 = vmul.f32 %v326, %v1715
    %v2033 = vmul.f32 %v333, %v1819
    %v2034 = vmul.f32 %v340, %v1923
    %v2035 = vmul.f32 %v347, %v2027
    %2036 = vst [vmem:[#allocation3 + $0x40] sm:$0xff] %v2028
    %2037 = vst [vmem:[#allocation3 + $0x48] sm:$0xff] %v2029
    %2038 = vst [vmem:[#allocation3 + $0x50] sm:$0xff] %v2030
    %2039 = vst [vmem:[#allocation3 + $0x58] sm:$0xff] %v2031
    %2040 = vst [vmem:[#allocation3 + $0x60] sm:$0xff] %v2032
    %2041 = vst [vmem:[#allocation3 + $0x68] sm:$0xff] %v2033
    %2042 = vst [vmem:[#allocation3 + $0x70] sm:$0xff] %v2034
    %2043 = vst [vmem:[#allocation3 + $0x78] sm:$0xff] %v2035
    // Predicated region
    $region6: #{tpu_custom_call.1} parent=1 // pred_check
      _
    $region7: #{tpu_custom_call.1} parent=1 // pred_check_branch
      %2045 = sbr.rel (0) target = $region9
    $region8: #{tpu_custom_call.1} parent=1 // pred_region
      %s2047 = ssub.s32 2048, 2048
      %2048 = vsyncadd [#allocation4], %s2047
      %s2049 = sshll.u32 [#allocation3], 4
      %s2050 = int_to_ptr.vmem [resolvable:$true] %s2049
      %2055 = dma.vmem_to_hbm [thread:$0]  %s2050, 2048, %s1, [#allocation4], 1024, 1024, 64
    $region9: #{tpu_custom_call.1} parent=1 // pred_fallthru
      _
    // Predicated region
    $region10: #{tpu_custom_call.1} parent=1 // pred_check
      _
    $region11: #{tpu_custom_call.1} parent=1 // pred_check_branch
      %2057 = sbr.rel (0) target = $region13
    $region12: #{tpu_custom_call.1} parent=1 // pred_region
      %2058 = dma.done [#allocation4], 2048
    $region13: #{tpu_custom_call.1} parent=1 // pred_fallthru
      _
    %2059 = vsyncpa [#allocation4], 1

</llo_original>
